<compile_context>
chip_gen: v6e
topology: v6e:2x2x1
jax: 0.10.0
libtpu: 0.0.40
codegen_flags: <defaults>
</compile_context>

<pallas_src>
import functools

import jax
import jax.numpy as jnp
from jax import lax
from jax.experimental import pallas as pl
from jax.experimental.pallas import tpu as pltpu


def _round_up(x, m):
    return (x + m - 1) // m * m


def _vmem_limit_bytes():
    """~75% of per-core VMEM (≈96 MiB on v5e/v6e, ≈48 MiB on v7x), capped at 100 MiB."""
    try:
        cap = int(pltpu.get_tpu_info().vmem_capacity_bytes)
    except Exception:                                  # conservative (v7x-sized) fallback
        cap = 64 * 1024 * 1024
    return int(max(32 * 1024 * 1024, min(cap * 3 // 4, 100 * 1024 * 1024)))


def _pick_batch_tile(n, l_out, l_pad, target_rows=256):
    """Fold batch elements so matmul M >= ~256 rows (MXU fill), but keep >=2 batch grid steps
    when possible (megacore / v7x 2-TC sharding)."""
    if n <= 1 or l_pad >= target_rows or (l_out % 8) != 0:
        return 1
    want = max(1, min(n, target_rows // max(l_pad, 1)))
    want = max(1, min(want, n // 2))
    for bt in range(want, 0, -1):
        if n % bt == 0:
            return bt
    return 1


def _pick_chunk(l_out, b_tile, target_rows=512):
    """L chunk (multiple of 8) so per-chunk f32 temporaries stay bounded."""
    per = max(8, (max(target_rows // max(b_tile, 1), 8) // 8) * 8)
    return int(min(_round_up(l_out, 8), per))


# ----------------------------------------------------------------------------
# Fused stage kernel. grid = (batch tiles, num_blocks); block axis is sequential ("arbitrary"),
# the activation is the VMEM-resident output block. Each grid step runs the layers_per_block
# MBConv layers of one EncoderBlock with compile-time dilations.
# ----------------------------------------------------------------------------
def _stage_kernel(xp_ref,                        # (B_TILE, Lr, CK_pad) tap-folded padded input
                  wd_ref, bd_ref,                # (2, CK_pad, C_pad), (1, C_pad)
                  w1_ref, b1_ref,                # (NL|LPB, C_pad, H_pad), (NL|LPB, 1, H_pad)
                  wdw_ref, bdw_ref,              # (NL|LPB, K, H_pad),     (NL|LPB, 1, H_pad)
                  w2_ref, b2_ref,                # (NL|LPB, H_pad, C_pad), (NL|LPB, 1, C_pad)
                  o_ref,                         # (B_TILE, L_pad, C_pad) resident activation
                  dw_ref,                        # scratch (B_TILE, Ldw, H_pad), activation dtype
                  *, K, L_out, L_pad, pad_top, pad_half, dil_block,
                  layers_per_block, chunk, weights_resident):
    blk = pl.program_id(1)
    B_TILE, _, C_pad = o_ref.shape
    Ldw, H_pad = dw_ref.shape[1], dw_ref.shape[2]
    n_chunks = -(-L_out // chunk)

    # ---- first block for this batch tile: strided downscale conv + one-time zero init ----
    @pl.when(blk == 0)
    def _():
        for ci in range(n_chunks):
            st = ci * chunk
            rows = min(chunk, L_out - st)
            # Conv1d(C_in, C, kernel=scale+1, stride=scale, padding=1): taps 0..s-1 folded into
            # one CK contraction (row o), tap s comes from row o+1.
            x0 = xp_ref[:, st:st + rows, :].reshape(B_TILE * rows, -1)
            x1 = xp_ref[:, st + 1:st + rows + 1, :].reshape(B_TILE * rows, -1)
            a = (jnp.dot(x0, wd_ref[0], preferred_element_type=jnp.float32)
                 + jnp.dot(x1, wd_ref[1], preferred_element_type=jnp.float32)
                 + bd_ref[...].astype(jnp.float32))
            o_ref[:, st:st + rows, :] = a.reshape(B_TILE, rows, C_pad).astype(o_ref.dtype)
        if L_pad > L_out:                         # zero sublane-padding rows once
            o_ref[:, L_out:L_pad, :] = jnp.zeros((B_TILE, L_pad - L_out, C_pad), o_ref.dtype)
        # zero depthwise halo rows once; they are never rewritten afterwards.
        if pad_top > 0:
            dw_ref[:, 0:pad_top, :] = jnp.zeros((B_TILE, pad_top, H_pad), dw_ref.dtype)
        if Ldw > pad_top + L_out:
            dw_ref[:, pad_top + L_out:Ldw, :] = jnp.zeros(
                (B_TILE, Ldw - pad_top - L_out, H_pad), dw_ref.dtype)

    # ---- layers_per_block MBConv layers of this EncoderBlock (static per-layer dilation) ----
    for p in range(layers_per_block):
        dil = dil_block[p]
        off0 = pad_top - dil * pad_half           # static "same"-padding offset for this layer
        li = (blk * layers_per_block + p) if weights_resident else p

        b1 = b1_ref[li].astype(jnp.float32)       # (1, H_pad)
        wdw = wdw_ref[li].astype(jnp.float32)     # (K, H_pad)
        bdw = bdw_ref[li].astype(jnp.float32)     # (1, H_pad)
        b2 = b2_ref[li].astype(jnp.float32)       # (1, C_pad)

        # Pass A: 1x1 expand + SiLU -> depthwise staging scratch (activation dtype), chunked.
        for ci in range(n_chunks):
            st = ci * chunk
            rows = min(chunk, L_out - st)
            xin = o_ref[:, st:st + rows, :].reshape(B_TILE * rows, C_pad)
            h = jnp.dot(xin, w1_ref[li], preferred_element_type=jnp.float32) + b1
            h = h * jax.nn.sigmoid(h)             # SiLU (f32, EUP)
            dw_ref[:, pad_top + st:pad_top + st + rows, :] = (
                h.reshape(B_TILE, rows, H_pad).astype(dw_ref.dtype))

        # Pass B: dilated depthwise (static offsets) + SiLU -> 1x1 project -> residual, chunked.
        for ci in range(n_chunks):
            st = ci * chunk
            rows = min(chunk, L_out - st)
            win = dw_ref[:, st:st + rows + 2 * pad_top, :].astype(jnp.float32)
            acc = win[:, off0:off0 + rows, :] * wdw[0:1, :]
            for t in range(1, K):
                ofs = off0 + t * dil
                acc = acc + win[:, ofs:ofs + rows, :] * wdw[t:t + 1, :]
            y = acc + bdw
            y = y * jax.nn.sigmoid(y)             # SiLU
            out = (jnp.dot(y.reshape(B_TILE * rows, H_pad).astype(w2_ref.dtype), w2_ref[li],
                           preferred_element_type=jnp.float32) + b2)
            out = (out.reshape(B_TILE, rows, C_pad)
                   + o_ref[:, st:st + rows, :].astype(jnp.float32))   # residual (re-read)
            o_ref[:, st:st + rows, :] = out.astype(o_ref.dtype)


# ----------------------------------------------------------------------------
# Parameter construction (logical shapes) and kernel-layout packing (padded/stacked).
# ----------------------------------------------------------------------------
def make_params(key, *, in_channels, out_channels, kernel, scale, num_layers):
    C, H, K, Kd = out_channels, out_channels * 2, kernel, scale + 1
    keys = jax.random.split(key, 2 + 6 * num_layers)
    it = iter(keys)

    def nrm(shape, fan_in):
        return jax.random.normal(next(it), shape, jnp.float32) / jnp.sqrt(float(fan_in))

    params = {
        "down_w": nrm((Kd, in_channels, C), in_channels * Kd),   # (tap, C_in, C_out)
        "down_b": nrm((C,), in_channels * Kd),
        "mbconv": [],
    }
    for _ in range(num_layers):
        params["mbconv"].append({
            "w1": nrm((C, H), C), "b1": nrm((H,), C),
            "wdw": nrm((K, H), K), "bdw": nrm((H,), K),
            "w2": nrm((H, C), H), "b2": nrm((C,), H),
        })
    return params


def _pack_params(params, *, in_channels, out_channels, kernel, scale, dtype):
    C, H, K, s = out_channels, out_channels * 2, kernel, scale
    nl = len(params["mbconv"])
    C_pad, H_pad = _round_up(C, 128), _round_up(H, 128)
    CK = s * in_channels
    CK_pad = _round_up(CK, 128)

    wd = params["down_w"].astype(dtype)                        # (s+1, C_in, C)
    Wd = jnp.zeros((2, CK_pad, C_pad), dtype)
    Wd = Wd.at[0, :CK, :C].set(wd[:s].reshape(CK, C))          # taps 0..s-1 folded
    Wd = Wd.at[1, :in_channels, :C].set(wd[s])                 # tap s
    bd = jnp.zeros((1, C_pad), dtype).at[0, :C].set(params["down_b"].astype(dtype))

    def _stack(name):
        return jnp.stack([m[name] for m in params["mbconv"]]).astype(dtype)

    W1 = jnp.zeros((nl, C_pad, H_pad), dtype).at[:, :C, :H].set(_stack("w1"))
    B1 = jnp.zeros((nl, 1, H_pad), dtype).at[:, 0, :H].set(_stack("b1"))
    Wdw = jnp.zeros((nl, K, H_pad), dtype).at[:, :, :H].set(_stack("wdw"))
    Bdw = jnp.zeros((nl, 1, H_pad), dtype).at[:, 0, :H].set(_stack("bdw"))
    W2 = jnp.zeros((nl, H_pad, C_pad), dtype).at[:, :H, :C].set(_stack("w2"))
    B2 = jnp.zeros((nl, 1, C_pad), dtype).at[:, 0, :C].set(_stack("b2"))
    return dict(Wd=Wd, bd=bd, W1=W1, B1=B1, Wdw=Wdw, Bdw=Bdw, W2=W2, B2=B2)


# ----------------------------------------------------------------------------
# EncoderStage forward: downscale -> num_blocks * EncoderBlock -> Identity, one pallas_call.
# ----------------------------------------------------------------------------
def encoder_stage_forward(x_ncl, params, *, kernel, scale, num_blocks, layers_per_block,
                          dilation_factor=2, dtype=jnp.float32,
                          l_chunk_target=512, batch_rows_target=256):
    N, C_in, L = x_ncl.shape
    C = params["down_b"].shape[0]
    H = 2 * C
    K, s, Kd = kernel, scale, scale + 1
    assert layers_per_block is not None and layers_per_block >= 1, \
        "AttentionLayer path (layers_per_block=None) not implemented"
    assert K % 2 == 1, "even depthwise kernel sizes are unsupported (asymmetric 'same' padding)"
    num_layers = num_blocks * layers_per_block
    assert len(params["mbconv"]) == num_layers

    # per-EncoderBlock dilations: [1, df, df^2, ...] (first MBConv has default dilation=1)
    dil_block = tuple([1] + [dilation_factor ** (i + 1) for i in range(layers_per_block - 1)])
    pad_half = (K - 1) // 2
    pad_max = max(dil_block) * pad_half
    pad_top = _round_up(pad_max, 8) if pad_max > 0 else 0      # sublane-aligned top halo

    L_out = (L + 2 - Kd) // s + 1
    assert L_out > 0
    L_pad = _round_up(L_out, 8)
    Lr = max(L_out + 1, -(-(L + 2) // s))                      # rows of the tap-folded input
    Ls = Lr * s

    C_pad, H_pad = _round_up(C, 128), _round_up(H, 128)
    CK = s * C_in
    CK_pad = _round_up(CK, 128)
    Ldw = L_pad + 2 * pad_top

    B_TILE = _pick_batch_tile(N, L_out, L_pad, target_rows=batch_rows_target)
    chunk = _pick_chunk(L_out, B_TILE, target_rows=l_chunk_target)
    vmem_limit = _vmem_limit_bytes()

    pk = _pack_params(params, in_channels=C_in, out_channels=C, kernel=K, scale=s, dtype=dtype)

    # Keep all per-layer weights VMEM-resident (DMA'd once) when they fit a modest budget;
    # otherwise stream one EncoderBlock's worth of weights per grid step.
    itemsize = jnp.dtype(dtype).itemsize
    stack_bytes = itemsize * num_layers * (2 * C_pad * H_pad + K * H_pad + 2 * H_pad + C_pad)
    weights_resident = stack_bytes <= min(16 * 1024 * 1024, vmem_limit // 4)

    # NCL -> NLC, conv "padding=1" + tail zeros, fold s taps per row, pad lanes to 128.
    x_nlc = jnp.transpose(x_ncl, (0, 2, 1)).astype(dtype)
    xp = jnp.pad(x_nlc, ((0, 0), (1, Ls - L - 1), (0, 0)))
    xp_r = jnp.pad(xp.reshape(N, Lr, CK), ((0, 0), (0, 0), (0, CK_pad - CK)))

    if weights_resident:
        def wspec(shape):
            return pl.BlockSpec((num_layers,) + shape, lambda n, b: (0, 0, 0))
    else:
        def wspec(shape):
            return pl.BlockSpec((layers_per_block,) + shape, lambda n, b: (b, 0, 0))

    kern = functools.partial(
        _stage_kernel, K=K, L_out=L_out, L_pad=L_pad, pad_top=pad_top, pad_half=pad_half,
        dil_block=dil_block, layers_per_block=layers_per_block, chunk=chunk,
        weights_resident=weights_resident)

    out_pad = pl.pallas_call(
        kern,
        out_shape=jax.ShapeDtypeStruct((N, L_pad, C_pad), dtype),
        grid_spec=pltpu.PrefetchScalarGridSpec(
            num_scalar_prefetch=0,
            grid=(N // B_TILE, num_blocks),
            in_specs=[
                pl.BlockSpec((B_TILE, Lr, CK_pad), lambda n, b: (n, 0, 0)),
                pl.BlockSpec((2, CK_pad, C_pad), lambda n, b: (0, 0, 0)),
                pl.BlockSpec((1, C_pad), lambda n, b: (0, 0)),
                wspec((C_pad, H_pad)),    # W1
                wspec((1, H_pad)),        # B1
                wspec((K, H_pad)),        # Wdw
                wspec((1, H_pad)),        # Bdw
                wspec((H_pad, C_pad)),    # W2
                wspec((1, C_pad)),        # B2
            ],
            out_specs=pl.BlockSpec((B_TILE, L_pad, C_pad), lambda n, b: (n, 0, 0)),
            scratch_shapes=[pltpu.VMEM((B_TILE, Ldw, H_pad), dtype)],
        ),
        compiler_params=pltpu.CompilerParams(
            dimension_semantics=("parallel", "arbitrary"),
            vmem_limit_bytes=vmem_limit,
        ),
    )(xp_r, pk["Wd"], pk["bd"], pk["W1"], pk["B1"], pk["Wdw"], pk["Bdw"], pk["W2"], pk["B2"])

    # self.final == nn.Identity() (last_stage=False); strip padding, back to (N, C_out, L_out).
    return jnp.transpose(out_pad[:, :L_out, :C], (0, 2, 1))


# ----------------------------------------------------------------------------
# Independent pure-JAX reference (lax.conv based) for a numerics sanity check.
# ----------------------------------------------------------------------------
def encoder_stage_reference(x_ncl, params, *, kernel, scale, num_blocks, layers_per_block,
                            dilation_factor=2):
    x = x_ncl.astype(jnp.float32)
    wd = params["down_w"].astype(jnp.float32)                  # (tap, C_in, C_out)
    w_oik = jnp.transpose(wd, (2, 1, 0))                       # (C_out, C_in, K)
    y = lax.conv_general_dilated(x, w_oik, window_strides=(scale,), padding=[(1, 1)],
                                 dimension_numbers=("NCH", "OIH", "NCH"))
    y = y + params["down_b"].astype(jnp.float32)[None, :, None]
    dil_block = [1] + [dilation_factor ** (i + 1) for i in range(layers_per_block - 1)]
    for i, m in enumerate(params["mbconv"]):
        d = dil_block[i % layers_per_block]
        h = (jnp.einsum("ncl,ch->nhl", y, m["w1"].astype(jnp.float32))
             + m["b1"].astype(jnp.float32)[None, :, None])
        h = h * jax.nn.sigmoid(h)
        wdw = jnp.transpose(m["wdw"].astype(jnp.float32), (1, 0))[:, None, :]   # (H, 1, K)
        pad = d * ((kernel - 1) // 2)
        z = lax.conv_general_dilated(h, wdw, window_strides=(1,), padding=[(pad, pad)],
                                     rhs_dilation=(d,), dimension_numbers=("NCH", "OIH", "NCH"),
                                     feature_group_count=h.shape[1])
        z = z + m["bdw"].astype(jnp.float32)[None, :, None]
        z = z * jax.nn.sigmoid(z)
        o = (jnp.einsum("nhl,hc->ncl", z, m["w2"].astype(jnp.float32))
             + m["b2"].astype(jnp.float32)[None, :, None])
        y = y + o
    return y


if __name__ == "__main__":
    # EncoderStage(in_channels=4, out_channels=32, kernel=3, scale=2, seq_len=32,
    #              num_blocks=2, layers_per_block=2, se_ratio=None, last_stage=False)
    IN_C, OUT_C, KERNEL, SCALE = 4, 32, 3, 2
    NUM_BLOCKS, LAYERS_PER_BLOCK = 2, 2
    N, L = 4, 64

    root = jax.random.PRNGKey(0)
    k_x, k_p = jax.random.split(root)
    x = jax.random.normal(k_x, (N, IN_C, L), jnp.float32)      # PyTorch NCL input
    params = make_params(k_p, in_channels=IN_C, out_channels=OUT_C, kernel=KERNEL,
                         scale=SCALE, num_layers=NUM_BLOCKS * LAYERS_PER_BLOCK)

    common = dict(kernel=KERNEL, scale=SCALE, num_blocks=NUM_BLOCKS,
                  layers_per_block=LAYERS_PER_BLOCK)

    # 1) f32 configuration: check numerics against the independent lax.conv reference
    #    (loose tolerance: TPU matmul/conv default precision differences).
    y32 = jax.block_until_ready(jax.jit(functools.partial(
        encoder_stage_forward, dtype=jnp.float32, **common))(x, params))
    y_ref = encoder_stage_reference(x, params, **common)
    assert y32.shape == (N, OUT_C, L // SCALE), y32.shape
    rel = float(jnp.max(jnp.abs(y32 - y_ref)) / (jnp.max(jnp.abs(y_ref)) + 1e-6))
    assert rel < 3e-2, f"f32 kernel mismatch vs reference: rel={rel}"

    # 2) bf16 configuration (perf setting from the review): bf16 weights/activations/staging,
    #    f32 MXU accumulation and VPU/EUP math.
    y16 = jax.block_until_ready(jax.jit(functools.partial(
        encoder_stage_forward, dtype=jnp.bfloat16, **common))(x, params))
    assert y16.shape == (N, OUT_C, L // SCALE), y16.shape
    assert bool(jnp.all(jnp.isfinite(y16.astype(jnp.float32))))

    print("KERNEL_OK")
</pallas_src>

<mosaic_0001>
module attributes {stable_mosaic.version = 11 : i64} {
  func.func @_stage_kernel(%arg0: i32, %arg1: i32, %arg2: memref<2x33x128xf32, #tpu.memory_space<vmem>>, %arg3: memref<2x128x128xf32, #tpu.memory_space<vmem>>, %arg4: memref<1x128xf32, #tpu.memory_space<vmem>>, %arg5: memref<4x128x128xf32, #tpu.memory_space<vmem>>, %arg6: memref<4x1x128xf32, #tpu.memory_space<vmem>>, %arg7: memref<4x3x128xf32, #tpu.memory_space<vmem>>, %arg8: memref<4x1x128xf32, #tpu.memory_space<vmem>>, %arg9: memref<4x128x128xf32, #tpu.memory_space<vmem>>, %arg10: memref<4x1x128xf32, #tpu.memory_space<vmem>>, %arg11: memref<2x32x128xf32, #tpu.memory_space<vmem>>, %arg12: memref<2x48x128xf32, #tpu.memory_space<vmem>>) attributes {dimension_semantics = [#tpu.dimension_semantics<parallel>, #tpu.dimension_semantics<arbitrary>], iteration_bounds = array<i64: 2, 2>, scalar_prefetch = 0 : i64, scratch_operands = 1 : i64, tpu.core_type = #tpu.core_type<tc>, window_params = [{transform_indices = @transform_0, window_bounds = array<i64: 2, 33, 128>}, {pipeline_mode = #tpu.pipeline_mode<synchronous>, transform_indices = @transform_1, window_bounds = array<i64: 2, 128, 128>}, {pipeline_mode = #tpu.pipeline_mode<synchronous>, transform_indices = @transform_2, window_bounds = array<i64: 1, 128>}, {pipeline_mode = #tpu.pipeline_mode<synchronous>, transform_indices = @transform_3, window_bounds = array<i64: 4, 128, 128>}, {pipeline_mode = #tpu.pipeline_mode<synchronous>, transform_indices = @transform_4, window_bounds = array<i64: 4, 1, 128>}, {pipeline_mode = #tpu.pipeline_mode<synchronous>, transform_indices = @transform_5, window_bounds = array<i64: 4, 3, 128>}, {pipeline_mode = #tpu.pipeline_mode<synchronous>, transform_indices = @transform_6, window_bounds = array<i64: 4, 1, 128>}, {pipeline_mode = #tpu.pipeline_mode<synchronous>, transform_indices = @transform_7, window_bounds = array<i64: 4, 128, 128>}, {pipeline_mode = #tpu.pipeline_mode<synchronous>, transform_indices = @transform_8, window_bounds = array<i64: 4, 1, 128>}, {transform_indices = @transform_9, window_bounds = array<i64: 2, 32, 128>}]} {
    %c0_i32 = arith.constant 0 : i32
    %0 = arith.cmpi eq, %arg1, %c0_i32 : i32
    %1 = arith.extui %0 : i1 to i32
    %c0_i32_0 = arith.constant 0 : i32
    %2 = arith.cmpi ne, %1, %c0_i32_0 : i32
    scf.if %2 {
      %c0_62 = arith.constant 0 : index
      %c0_63 = arith.constant 0 : index
      %c0_64 = arith.constant 0 : index
      %139 = vector.load %arg2[%c0_62, %c0_63, %c0_64] : memref<2x33x128xf32, #tpu.memory_space<vmem>>, vector<2x32x128xf32>
      %140 = vector.shape_cast %139 : vector<2x32x128xf32> to vector<64x128xf32>
      %c0_65 = arith.constant 0 : index
      %c1 = arith.constant 1 : index
      %c0_66 = arith.constant 0 : index
      %141 = vector.load %arg2[%c0_65, %c1, %c0_66] : memref<2x33x128xf32, #tpu.memory_space<vmem>>, vector<2x32x128xf32>
      %142 = vector.shape_cast %141 : vector<2x32x128xf32> to vector<64x128xf32>
      %c0_67 = arith.constant 0 : index
      %c0_68 = arith.constant 0 : index
      %c0_69 = arith.constant 0 : index
      %143 = vector.load %arg3[%c0_67, %c0_68, %c0_69] : memref<2x128x128xf32, #tpu.memory_space<vmem>>, vector<1x128x128xf32>
      %144 = vector.shape_cast %143 : vector<1x128x128xf32> to vector<128x128xf32>
      %cst_70 = arith.constant dense<0.000000e+00> : vector<64x128xf32>
      %145 = tpu.matmul %140, %144, %cst_70 {dimension_numbers = #tpu.dot_dimension_numbers<[1], [0], [0], [1], [0, 0, 1, 1], [], []>} : vector<64x128xf32>, vector<128x128xf32>, vector<64x128xf32> -> vector<64x128xf32>
      %c1_71 = arith.constant 1 : index
      %c0_72 = arith.constant 0 : index
      %c0_73 = arith.constant 0 : index
      %146 = vector.load %arg3[%c1_71, %c0_72, %c0_73] : memref<2x128x128xf32, #tpu.memory_space<vmem>>, vector<1x128x128xf32>
      %147 = vector.shape_cast %146 : vector<1x128x128xf32> to vector<128x128xf32>
      %cst_74 = arith.constant dense<0.000000e+00> : vector<64x128xf32>
      %148 = tpu.matmul %142, %147, %cst_74 {dimension_numbers = #tpu.dot_dimension_numbers<[1], [0], [0], [1], [0, 0, 1, 1], [], []>} : vector<64x128xf32>, vector<128x128xf32>, vector<64x128xf32> -> vector<64x128xf32>
      %149 = arith.addf %145, %148 : vector<64x128xf32>
      %c0_75 = arith.constant 0 : index
      %c0_76 = arith.constant 0 : index
      %150 = vector.load %arg4[%c0_75, %c0_76] : memref<1x128xf32, #tpu.memory_space<vmem>>, vector<1x128xf32>
      %151 = vector.broadcast %150 : vector<1x128xf32> to vector<64x128xf32>
      %152 = arith.addf %149, %151 : vector<64x128xf32>
      %153 = vector.shape_cast %152 : vector<64x128xf32> to vector<2x32x128xf32>
      %c0_77 = arith.constant 0 : index
      %c0_78 = arith.constant 0 : index
      %c0_79 = arith.constant 0 : index
      %154 = vector.load %arg11[%c0_77, %c0_78, %c0_79] : memref<2x32x128xf32, #tpu.memory_space<vmem>>, vector<2x32x128xf32>
      tpu.vector_store %arg11[%c0_77, %c0_78, %c0_79], %153 {strides = array<i32>} : memref<2x32x128xf32, #tpu.memory_space<vmem>>, vector<2x32x128xf32>,
      %cst_80 = arith.constant 0.000000e+00 : f32
      %155 = vector.broadcast %cst_80 : f32 to vector<2x8x128xf32>
      %c0_81 = arith.constant 0 : index
      %c0_82 = arith.constant 0 : index
      %c0_83 = arith.constant 0 : index
      %156 = vector.load %arg12[%c0_81, %c0_82, %c0_83] : memref<2x48x128xf32, #tpu.memory_space<vmem>>, vector<2x8x128xf32>
      tpu.vector_store %arg12[%c0_81, %c0_82, %c0_83], %155 {strides = array<i32>} : memref<2x48x128xf32, #tpu.memory_space<vmem>>, vector<2x8x128xf32>,
      %cst_84 = arith.constant 0.000000e+00 : f32
      %157 = vector.broadcast %cst_84 : f32 to vector<2x8x128xf32>
      %c0_85 = arith.constant 0 : index
      %c40 = arith.constant 40 : index
      %c0_86 = arith.constant 0 : index
      %158 = vector.load %arg12[%c0_85, %c40, %c0_86] : memref<2x48x128xf32, #tpu.memory_space<vmem>>, vector<2x8x128xf32>
      tpu.vector_store %arg12[%c0_85, %c40, %c0_86], %157 {strides = array<i32>} : memref<2x48x128xf32, #tpu.memory_space<vmem>>, vector<2x8x128xf32>,
    } else {
    }
    %c2_i32 = arith.constant 2 : i32
    %3 = arith.muli %arg1, %c2_i32 : i32
    %c0_i32_1 = arith.constant 0 : i32
    %4 = arith.addi %3, %c0_i32_1 : i32
    %5 = arith.index_cast %4 : i32 to index
    %c0 = arith.constant 0 : index
    %c0_2 = arith.constant 0 : index
    %6 = vector.load %arg6[%5, %c0, %c0_2] : memref<4x1x128xf32, #tpu.memory_space<vmem>>, vector<1x1x128xf32>
    %7 = vector.shape_cast %6 : vector<1x1x128xf32> to vector<1x128xf32>
    %8 = arith.index_cast %4 : i32 to index
    %c0_3 = arith.constant 0 : index
    %c0_4 = arith.constant 0 : index
    %9 = vector.load %arg7[%8, %c0_3, %c0_4] : memref<4x3x128xf32, #tpu.memory_space<vmem>>, vector<1x3x128xf32>
    %10 = vector.shape_cast %9 : vector<1x3x128xf32> to vector<3x128xf32>
    %11 = arith.index_cast %4 : i32 to index
    %c0_5 = arith.constant 0 : index
    %c0_6 = arith.constant 0 : index
    %12 = vector.load %arg8[%11, %c0_5, %c0_6] : memref<4x1x128xf32, #tpu.memory_space<vmem>>, vector<1x1x128xf32>
    %13 = vector.shape_cast %12 : vector<1x1x128xf32> to vector<1x128xf32>
    %14 = arith.index_cast %4 : i32 to index
    %c0_7 = arith.constant 0 : index
    %c0_8 = arith.constant 0 : index
    %15 = vector.load %arg10[%14, %c0_7, %c0_8] : memref<4x1x128xf32, #tpu.memory_space<vmem>>, vector<1x1x128xf32>
    %16 = vector.shape_cast %15 : vector<1x1x128xf32> to vector<1x128xf32>
    %c0_9 = arith.constant 0 : index
    %c0_10 = arith.constant 0 : index
    %c0_11 = arith.constant 0 : index
    %17 = vector.load %arg11[%c0_9, %c0_10, %c0_11] : memref<2x32x128xf32, #tpu.memory_space<vmem>>, vector<2x32x128xf32>
    %18 = vector.shape_cast %17 : vector<2x32x128xf32> to vector<64x128xf32>
    %19 = arith.index_cast %4 : i32 to index
    %c0_12 = arith.constant 0 : index
    %c0_13 = arith.constant 0 : index
    %20 = vector.load %arg5[%19, %c0_12, %c0_13] : memref<4x128x128xf32, #tpu.memory_space<vmem>>, vector<1x128x128xf32>
    %21 = vector.shape_cast %20 : vector<1x128x128xf32> to vector<128x128xf32>
    %cst = arith.constant dense<0.000000e+00> : vector<64x128xf32>
    %22 = tpu.matmul %18, %21, %cst {dimension_numbers = #tpu.dot_dimension_numbers<[1], [0], [0], [1], [0, 0, 1, 1], [], []>} : vector<64x128xf32>, vector<128x128xf32>, vector<64x128xf32> -> vector<64x128xf32>
    %23 = vector.broadcast %7 : vector<1x128xf32> to vector<64x128xf32>
    %24 = arith.addf %22, %23 : vector<64x128xf32>
    %25 = arith.negf %24 : vector<64x128xf32>
    %26 = math.exp %25 : vector<64x128xf32>
    %cst_14 = arith.constant 1.000000e+00 : f32
    %27 = vector.broadcast %cst_14 : f32 to vector<64x128xf32>
    %28 = arith.addf %27, %26 : vector<64x128xf32>
    %29 = arith.divf %27, %28 : vector<64x128xf32>
    %30 = arith.mulf %24, %29 : vector<64x128xf32>
    %31 = vector.shape_cast %30 : vector<64x128xf32> to vector<2x32x128xf32>
    %c0_15 = arith.constant 0 : index
    %c8 = arith.constant 8 : index
    %c0_16 = arith.constant 0 : index
    %32 = vector.load %arg12[%c0_15, %c8, %c0_16] : memref<2x48x128xf32, #tpu.memory_space<vmem>>, vector<2x32x128xf32>
    tpu.vector_store %arg12[%c0_15, %c8, %c0_16], %31 {strides = array<i32>} : memref<2x48x128xf32, #tpu.memory_space<vmem>>, vector<2x32x128xf32>,
    %c0_17 = arith.constant 0 : index
    %c0_18 = arith.constant 0 : index
    %c0_19 = arith.constant 0 : index
    %33 = vector.load %arg12[%c0_17, %c0_18, %c0_19] : memref<2x48x128xf32, #tpu.memory_space<vmem>>, vector<2x48x128xf32>
    %34 = vector.extract_strided_slice %33 {offsets = [0, 7, 0], sizes = [2, 32, 128], strides = [1, 1, 1]} : vector<2x48x128xf32> to vector<2x32x128xf32>
    %35 = vector.extract_strided_slice %10 {offsets = [0, 0], sizes = [1, 128], strides = [1, 1]} : vector<3x128xf32> to vector<1x128xf32>
    %36 = vector.shape_cast %35 : vector<1x128xf32> to vector<1x1x128xf32>
    %37 = vector.broadcast %36 : vector<1x1x128xf32> to vector<2x32x128xf32>
    %38 = arith.mulf %34, %37 : vector<2x32x128xf32>
    %39 = vector.extract_strided_slice %33 {offsets = [0, 8, 0], sizes = [2, 32, 128], strides = [1, 1, 1]} : vector<2x48x128xf32> to vector<2x32x128xf32>
    %40 = vector.extract_strided_slice %10 {offsets = [1, 0], sizes = [1, 128], strides = [1, 1]} : vector<3x128xf32> to vector<1x128xf32>
    %41 = vector.shape_cast %40 : vector<1x128xf32> to vector<1x1x128xf32>
    %42 = vector.broadcast %41 : vector<1x1x128xf32> to vector<2x32x128xf32>
    %43 = arith.mulf %39, %42 : vector<2x32x128xf32>
    %44 = arith.addf %38, %43 : vector<2x32x128xf32>
    %45 = vector.extract_strided_slice %33 {offsets = [0, 9, 0], sizes = [2, 32, 128], strides = [1, 1, 1]} : vector<2x48x128xf32> to vector<2x32x128xf32>
    %46 = vector.extract_strided_slice %10 {offsets = [2, 0], sizes = [1, 128], strides = [1, 1]} : vector<3x128xf32> to vector<1x128xf32>
    %47 = vector.shape_cast %46 : vector<1x128xf32> to vector<1x1x128xf32>
    %48 = vector.broadcast %47 : vector<1x1x128xf32> to vector<2x32x128xf32>
    %49 = arith.mulf %45, %48 : vector<2x32x128xf32>
    %50 = arith.addf %44, %49 : vector<2x32x128xf32>
    %51 = vector.shape_cast %13 : vector<1x128xf32> to vector<1x1x128xf32>
    %52 = vector.broadcast %51 : vector<1x1x128xf32> to vector<2x32x128xf32>
    %53 = arith.addf %50, %52 : vector<2x32x128xf32>
    %54 = arith.negf %53 : vector<2x32x128xf32>
    %55 = math.exp %54 : vector<2x32x128xf32>
    %cst_20 = arith.constant 1.000000e+00 : f32
    %56 = vector.broadcast %cst_20 : f32 to vector<2x32x128xf32>
    %57 = arith.addf %56, %55 : vector<2x32x128xf32>
    %58 = arith.divf %56, %57 : vector<2x32x128xf32>
    %59 = arith.mulf %53, %58 : vector<2x32x128xf32>
    %60 = vector.shape_cast %59 : vector<2x32x128xf32> to vector<64x128xf32>
    %61 = arith.index_cast %4 : i32 to index
    %c0_21 = arith.constant 0 : index
    %c0_22 = arith.constant 0 : index
    %62 = vector.load %arg9[%61, %c0_21, %c0_22] : memref<4x128x128xf32, #tpu.memory_space<vmem>>, vector<1x128x128xf32>
    %63 = vector.shape_cast %62 : vector<1x128x128xf32> to vector<128x128xf32>
    %cst_23 = arith.constant dense<0.000000e+00> : vector<64x128xf32>
    %64 = tpu.matmul %60, %63, %cst_23 {dimension_numbers = #tpu.dot_dimension_numbers<[1], [0], [0], [1], [0, 0, 1, 1], [], []>} : vector<64x128xf32>, vector<128x128xf32>, vector<64x128xf32> -> vector<64x128xf32>
    %65 = vector.broadcast %16 : vector<1x128xf32> to vector<64x128xf32>
    %66 = arith.addf %64, %65 : vector<64x128xf32>
    %67 = vector.shape_cast %66 : vector<64x128xf32> to vector<2x32x128xf32>
    %c0_24 = arith.constant 0 : index
    %c0_25 = arith.constant 0 : index
    %c0_26 = arith.constant 0 : index
    %68 = vector.load %arg11[%c0_24, %c0_25, %c0_26] : memref<2x32x128xf32, #tpu.memory_space<vmem>>, vector<2x32x128xf32>
    %69 = arith.addf %67, %68 : vector<2x32x128xf32>
    %c0_27 = arith.constant 0 : index
    %c0_28 = arith.constant 0 : index
    %c0_29 = arith.constant 0 : index
    %70 = vector.load %arg11[%c0_27, %c0_28, %c0_29] : memref<2x32x128xf32, #tpu.memory_space<vmem>>, vector<2x32x128xf32>
    tpu.vector_store %arg11[%c0_27, %c0_28, %c0_29], %69 {strides = array<i32>} : memref<2x32x128xf32, #tpu.memory_space<vmem>>, vector<2x32x128xf32>,
    %c2_i32_30 = arith.constant 2 : i32
    %71 = arith.muli %arg1, %c2_i32_30 : i32
    %c1_i32 = arith.constant 1 : i32
    %72 = arith.addi %71, %c1_i32 : i32
    %73 = arith.index_cast %72 : i32 to index
    %c0_31 = arith.constant 0 : index
    %c0_32 = arith.constant 0 : index
    %74 = vector.load %arg6[%73, %c0_31, %c0_32] : memref<4x1x128xf32, #tpu.memory_space<vmem>>, vector<1x1x128xf32>
    %75 = vector.shape_cast %74 : vector<1x1x128xf32> to vector<1x128xf32>
    %76 = arith.index_cast %72 : i32 to index
    %c0_33 = arith.constant 0 : index
    %c0_34 = arith.constant 0 : index
    %77 = vector.load %arg7[%76, %c0_33, %c0_34] : memref<4x3x128xf32, #tpu.memory_space<vmem>>, vector<1x3x128xf32>
    %78 = vector.shape_cast %77 : vector<1x3x128xf32> to vector<3x128xf32>
    %79 = arith.index_cast %72 : i32 to index
    %c0_35 = arith.constant 0 : index
    %c0_36 = arith.constant 0 : index
    %80 = vector.load %arg8[%79, %c0_35, %c0_36] : memref<4x1x128xf32, #tpu.memory_space<vmem>>, vector<1x1x128xf32>
    %81 = vector.shape_cast %80 : vector<1x1x128xf32> to vector<1x128xf32>
    %82 = arith.index_cast %72 : i32 to index
    %c0_37 = arith.constant 0 : index
    %c0_38 = arith.constant 0 : index
    %83 = vector.load %arg10[%82, %c0_37, %c0_38] : memref<4x1x128xf32, #tpu.memory_space<vmem>>, vector<1x1x128xf32>
    %84 = vector.shape_cast %83 : vector<1x1x128xf32> to vector<1x128xf32>
    %c0_39 = arith.constant 0 : index
    %c0_40 = arith.constant 0 : index
    %c0_41 = arith.constant 0 : index
    %85 = vector.load %arg11[%c0_39, %c0_40, %c0_41] : memref<2x32x128xf32, #tpu.memory_space<vmem>>, vector<2x32x128xf32>
    %86 = vector.shape_cast %85 : vector<2x32x128xf32> to vector<64x128xf32>
    %87 = arith.index_cast %72 : i32 to index
    %c0_42 = arith.constant 0 : index
    %c0_43 = arith.constant 0 : index
    %88 = vector.load %arg5[%87, %c0_42, %c0_43] : memref<4x128x128xf32, #tpu.memory_space<vmem>>, vector<1x128x128xf32>
    %89 = vector.shape_cast %88 : vector<1x128x128xf32> to vector<128x128xf32>
    %cst_44 = arith.constant dense<0.000000e+00> : vector<64x128xf32>
    %90 = tpu.matmul %86, %89, %cst_44 {dimension_numbers = #tpu.dot_dimension_numbers<[1], [0], [0], [1], [0, 0, 1, 1], [], []>} : vector<64x128xf32>, vector<128x128xf32>, vector<64x128xf32> -> vector<64x128xf32>
    %91 = vector.broadcast %75 : vector<1x128xf32> to vector<64x128xf32>
    %92 = arith.addf %90, %91 : vector<64x128xf32>
    %93 = arith.negf %92 : vector<64x128xf32>
    %94 = math.exp %93 : vector<64x128xf32>
    %cst_45 = arith.constant 1.000000e+00 : f32
    %95 = vector.broadcast %cst_45 : f32 to vector<64x128xf32>
    %96 = arith.addf %95, %94 : vector<64x128xf32>
    %97 = arith.divf %95, %96 : vector<64x128xf32>
    %98 = arith.mulf %92, %97 : vector<64x128xf32>
    %99 = vector.shape_cast %98 : vector<64x128xf32> to vector<2x32x128xf32>
    %c0_46 = arith.constant 0 : index
    %c8_47 = arith.constant 8 : index
    %c0_48 = arith.constant 0 : index
    %100 = vector.load %arg12[%c0_46, %c8_47, %c0_48] : memref<2x48x128xf32, #tpu.memory_space<vmem>>, vector<2x32x128xf32>
    tpu.vector_store %arg12[%c0_46, %c8_47, %c0_48], %99 {strides = array<i32>} : memref<2x48x128xf32, #tpu.memory_space<vmem>>, vector<2x32x128xf32>,
    %c0_49 = arith.constant 0 : index
    %c0_50 = arith.constant 0 : index
    %c0_51 = arith.constant 0 : index
    %101 = vector.load %arg12[%c0_49, %c0_50, %c0_51] : memref<2x48x128xf32, #tpu.memory_space<vmem>>, vector<2x48x128xf32>
    %102 = vector.extract_strided_slice %101 {offsets = [0, 6, 0], sizes = [2, 32, 128], strides = [1, 1, 1]} : vector<2x48x128xf32> to vector<2x32x128xf32>
    %103 = vector.extract_strided_slice %78 {offsets = [0, 0], sizes = [1, 128], strides = [1, 1]} : vector<3x128xf32> to vector<1x128xf32>
    %104 = vector.shape_cast %103 : vector<1x128xf32> to vector<1x1x128xf32>
    %105 = vector.broadcast %104 : vector<1x1x128xf32> to vector<2x32x128xf32>
    %106 = arith.mulf %102, %105 : vector<2x32x128xf32>
    %107 = vector.extract_strided_slice %101 {offsets = [0, 8, 0], sizes = [2, 32, 128], strides = [1, 1, 1]} : vector<2x48x128xf32> to vector<2x32x128xf32>
    %108 = vector.extract_strided_slice %78 {offsets = [1, 0], sizes = [1, 128], strides = [1, 1]} : vector<3x128xf32> to vector<1x128xf32>
    %109 = vector.shape_cast %108 : vector<1x128xf32> to vector<1x1x128xf32>
    %110 = vector.broadcast %109 : vector<1x1x128xf32> to vector<2x32x128xf32>
    %111 = arith.mulf %107, %110 : vector<2x32x128xf32>
    %112 = arith.addf %106, %111 : vector<2x32x128xf32>
    %113 = vector.extract_strided_slice %101 {offsets = [0, 10, 0], sizes = [2, 32, 128], strides = [1, 1, 1]} : vector<2x48x128xf32> to vector<2x32x128xf32>
    %114 = vector.extract_strided_slice %78 {offsets = [2, 0], sizes = [1, 128], strides = [1, 1]} : vector<3x128xf32> to vector<1x128xf32>
    %115 = vector.shape_cast %114 : vector<1x128xf32> to vector<1x1x128xf32>
    %116 = vector.broadcast %115 : vector<1x1x128xf32> to vector<2x32x128xf32>
    %117 = arith.mulf %113, %116 : vector<2x32x128xf32>
    %118 = arith.addf %112, %117 : vector<2x32x128xf32>
    %119 = vector.shape_cast %81 : vector<1x128xf32> to vector<1x1x128xf32>
    %120 = vector.broadcast %119 : vector<1x1x128xf32> to vector<2x32x128xf32>
    %121 = arith.addf %118, %120 : vector<2x32x128xf32>
    %122 = arith.negf %121 : vector<2x32x128xf32>
    %123 = math.exp %122 : vector<2x32x128xf32>
    %cst_52 = arith.constant 1.000000e+00 : f32
    %124 = vector.broadcast %cst_52 : f32 to vector<2x32x128xf32>
    %125 = arith.addf %124, %123 : vector<2x32x128xf32>
    %126 = arith.divf %124, %125 : vector<2x32x128xf32>
    %127 = arith.mulf %121, %126 : vector<2x32x128xf32>
    %128 = vector.shape_cast %127 : vector<2x32x128xf32> to vector<64x128xf32>
    %129 = arith.index_cast %72 : i32 to index
    %c0_53 = arith.constant 0 : index
    %c0_54 = arith.constant 0 : index
    %130 = vector.load %arg9[%129, %c0_53, %c0_54] : memref<4x128x128xf32, #tpu.memory_space<vmem>>, vector<1x128x128xf32>
    %131 = vector.shape_cast %130 : vector<1x128x128xf32> to vector<128x128xf32>
    %cst_55 = arith.constant dense<0.000000e+00> : vector<64x128xf32>
    %132 = tpu.matmul %128, %131, %cst_55 {dimension_numbers = #tpu.dot_dimension_numbers<[1], [0], [0], [1], [0, 0, 1, 1], [], []>} : vector<64x128xf32>, vector<128x128xf32>, vector<64x128xf32> -> vector<64x128xf32>
    %133 = vector.broadcast %84 : vector<1x128xf32> to vector<64x128xf32>
    %134 = arith.addf %132, %133 : vector<64x128xf32>
    %135 = vector.shape_cast %134 : vector<64x128xf32> to vector<2x32x128xf32>
    %c0_56 = arith.constant 0 : index
    %c0_57 = arith.constant 0 : index
    %c0_58 = arith.constant 0 : index
    %136 = vector.load %arg11[%c0_56, %c0_57, %c0_58] : memref<2x32x128xf32, #tpu.memory_space<vmem>>, vector<2x32x128xf32>
    %137 = arith.addf %135, %136 : vector<2x32x128xf32>
    %c0_59 = arith.constant 0 : index
    %c0_60 = arith.constant 0 : index
    %c0_61 = arith.constant 0 : index
    %138 = vector.load %arg11[%c0_59, %c0_60, %c0_61] : memref<2x32x128xf32, #tpu.memory_space<vmem>>, vector<2x32x128xf32>
    tpu.vector_store %arg11[%c0_59, %c0_60, %c0_61], %137 {strides = array<i32>} : memref<2x32x128xf32, #tpu.memory_space<vmem>>, vector<2x32x128xf32>,
    return
  }
  func.func @transform_0(%arg0: i32, %arg1: i32) -> (i32, i32, i32) {
    %c0_i32 = arith.constant 0 : i32
    %c0_i32_0 = arith.constant 0 : i32
    %c0_i32_1 = arith.constant 0 : i32
    return %arg0, %c0_i32, %c0_i32_0 : i32, i32, i32
  }
  func.func @transform_1(%arg0: i32, %arg1: i32) -> (i32, i32, i32) {
    %c0_i32 = arith.constant 0 : i32
    %c0_i32_0 = arith.constant 0 : i32
    %c0_i32_1 = arith.constant 0 : i32
    %c0_i32_2 = arith.constant 0 : i32
    return %c0_i32, %c0_i32_0, %c0_i32_1 : i32, i32, i32
  }
  func.func @transform_2(%arg0: i32, %arg1: i32) -> (i32, i32) {
    %c0_i32 = arith.constant 0 : i32
    %c0_i32_0 = arith.constant 0 : i32
    %c0_i32_1 = arith.constant 0 : i32
    return %c0_i32, %c0_i32_0 : i32, i32
  }
  func.func @transform_3(%arg0: i32, %arg1: i32) -> (i32, i32, i32) {
    %c0_i32 = arith.constant 0 : i32
    %c0_i32_0 = arith.constant 0 : i32
    %c0_i32_1 = arith.constant 0 : i32
    %c0_i32_2 = arith.constant 0 : i32
    return %c0_i32, %c0_i32_0, %c0_i32_1 : i32, i32, i32
  }
  func.func @transform_4(%arg0: i32, %arg1: i32) -> (i32, i32, i32) {
    %c0_i32 = arith.constant 0 : i32
    %c0_i32_0 = arith.constant 0 : i32
    %c0_i32_1 = arith.constant 0 : i32
    %c0_i32_2 = arith.constant 0 : i32
    return %c0_i32, %c0_i32_0, %c0_i32_1 : i32, i32, i32
  }
  func.func @transform_5(%arg0: i32, %arg1: i32) -> (i32, i32, i32) {
    %c0_i32 = arith.constant 0 : i32
    %c0_i32_0 = arith.constant 0 : i32
    %c0_i32_1 = arith.constant 0 : i32
    %c0_i32_2 = arith.constant 0 : i32
    return %c0_i32, %c0_i32_0, %c0_i32_1 : i32, i32, i32
  }
  func.func @transform_6(%arg0: i32, %arg1: i32) -> (i32, i32, i32) {
    %c0_i32 = arith.constant 0 : i32
    %c0_i32_0 = arith.constant 0 : i32
    %c0_i32_1 = arith.constant 0 : i32
    %c0_i32_2 = arith.constant 0 : i32
    return %c0_i32, %c0_i32_0, %c0_i32_1 : i32, i32, i32
  }
  func.func @transform_7(%arg0: i32, %arg1: i32) -> (i32, i32, i32) {
    %c0_i32 = arith.constant 0 : i32
    %c0_i32_0 = arith.constant 0 : i32
    %c0_i32_1 = arith.constant 0 : i32
    %c0_i32_2 = arith.constant 0 : i32
    return %c0_i32, %c0_i32_0, %c0_i32_1 : i32, i32, i32
  }
  func.func @transform_8(%arg0: i32, %arg1: i32) -> (i32, i32, i32) {
    %c0_i32 = arith.constant 0 : i32
    %c0_i32_0 = arith.constant 0 : i32
    %c0_i32_1 = arith.constant 0 : i32
    %c0_i32_2 = arith.constant 0 : i32
    return %c0_i32, %c0_i32_0, %c0_i32_1 : i32, i32, i32
  }
  func.func @transform_9(%arg0: i32, %arg1: i32) -> (i32, i32, i32) {
    %c0_i32 = arith.constant 0 : i32
    %c0_i32_0 = arith.constant 0 : i32
    %c0_i32_1 = arith.constant 0 : i32
    return %arg0, %c0_i32, %c0_i32_0 : i32, i32, i32
  }
}

</mosaic_0001>

<llo_original>
// kernel: encoder_stage_forward.1
$region0: #{encoder_stage_forward.1}
  #allocation0 [shape = 'u32[]', space=smem, size = 0x4, offset = 0x4, fixed_abs, tag = 'smem constant byte address 0x4 - core index']
  #allocation1 [shape = 'u32[144,128]{1,0:T(1,128)}', space=vmem, size = 0x12000, scoped, tag = 'internal scratch']
  #allocation2 [shape = 'f32[2,48,128]{2,1,0:T(8,128)}', space=vmem, size = 0xc000, scoped, tag = 'scratch operand']
  %s0 = inlined_call_operand.vmem [shape: f32[4,33,128], index: 0, kind: input, shape index: {}]
  %s1 = inlined_call_operand.vmem [shape: f32[2,128,128], index: 1, kind: input, shape index: {}]
  %s2 = inlined_call_operand.vmem [shape: f32[1,128], index: 2, kind: input, shape index: {}]
  %s3 = inlined_call_operand.vmem [shape: f32[4,128,128], index: 3, kind: input, shape index: {}]
  %s4 = inlined_call_operand.vmem [shape: f32[4,1,128], index: 4, kind: input, shape index: {}]
  %s5 = inlined_call_operand.vmem [shape: f32[4,3,128], index: 5, kind: input, shape index: {}]
  %s6 = inlined_call_operand.vmem [shape: f32[4,1,128], index: 6, kind: input, shape index: {}]
  %s7 = inlined_call_operand.vmem [shape: f32[4,128,128], index: 7, kind: input, shape index: {}]
  %s8 = inlined_call_operand.vmem [shape: f32[4,1,128], index: 8, kind: input, shape index: {}]
  %s9 = inlined_call_operand.vmem [shape: f32[4,32,128], index: 9, kind: output, shape index: {}]
  %s10 = sld [smem:[#allocation0]]
  $region73: #{encoder_stage_forward.1} parent=0
    _
  %s12 = ssub.s32 1, %s10
  %s13 = scalar_select 0, %s12, %s10
  loop: start=0, step=1, limit=6
  $region2: #{encoder_stage_forward.1} parent=0 // loop_pre_header
    _
  $region3: #{encoder_stage_forward.1} parent=0 // loop_header
    %s15 = sphi 0, %s19
    %p16 = scmp.ge.s32.totalorder %s15, 6
    %s22 = sphi 0, %s34
    %s23 = sphi 0, %s30
    %s24 = sphi 0, %s22
    %s25 = sphi 0, %s23
    %s26 = sphi 0, %s24
    %s27 = sphi 0, %s25
    %s37 = sphi 0, %s39
    %s40 = sphi 0, %s37
    %s41 = sphi 0, %s40
    %s57 = sphi 0, %s41
    %s61 = sphi 0, %s61
    %s63 = sphi 0, %s61
    %s64 = sphi 0, %s63
    %s78 = sphi 0, %s64
    %s82 = sphi 0, %s82
    %s84 = sphi 0, %s82
    %s85 = sphi 0, %s84
    %s99 = sphi 0, %s85
    %s103 = sphi 0, %s103
    %s105 = sphi 0, %s103
    %s106 = sphi 0, %s105
    %s120 = sphi 0, %s106
    %s124 = sphi 0, %s124
    %s126 = sphi 0, %s124
    %s127 = sphi 0, %s126
    %s141 = sphi 0, %s127
    %s145 = sphi 0, %s145
    %s147 = sphi 0, %s145
    %s148 = sphi 0, %s147
    %s162 = sphi 0, %s148
    %s166 = sphi 0, %s166
    %s168 = sphi 0, %s166
    %s169 = sphi 0, %s168
    %s183 = sphi 0, %s169
    %s187 = sphi 0, %s187
    %s189 = sphi 0, %s187
    %s190 = sphi 0, %s189
    %s204 = sphi 0, %s190
    %s208 = sphi 0, %s208
    %s210 = sphi 0, %s208
    %s211 = sphi 0, %s210
    %s225 = sphi 0, %s211
    %s231 = sphi 0, %s233
    %s234 = sphi 0, %s231
    %s235 = sphi 0, %s234
    %s251 = sphi 0, %s235
  $region4: #{encoder_stage_forward.1} parent=0 // loop_header_branch
    %18 = sbr.rel (%p16) target = $region8
  $region5: #{encoder_stage_forward.1} parent=0 // loop_body
    %s20 = ssub.s32 %s15, 1
    %s21 = ssub.s32 %s15, 2
    %s28 = sadd.s32 1, %s23
    %p29 = scmp.ge.s32.totalorder %s28, 2
    %s30 = scalar_select %p29, 0, %s28
    %s31 = sadd.s32 1, %s22
    %s32 = scalar_select %p29, %s31, %s22
    %p33 = scmp.ge.s32.totalorder %s32, 2
    %s34 = scalar_select %p33, 0, %s32
    %s35 = ssub.s32 %s22, %s34
    %p36 = scmp.eq.s32.totalorder %s35, 0
    %s38 = sadd.s32 %s37, 1
    %s39 = scalar_select %p36, %s37, %s38
    %p42 = pneg %p36
    %p43 = scmp.eq.s32.totalorder %s15, 3
    %p44 = por %p42, %p43
    %p45 = scmp.ne.s32.totalorder %s37, %s40
    %p46 = scmp.eq.s32.totalorder %s15, 0
    %p47 = por %p45, %p46
    %p48 = scmp.ne.s32.totalorder %s37, %s40
    %p49 = scmp.eq.s32.totalorder %s20, 3
    %p50 = por %p48, %p49
    %p51 = scmp.ne.s32.totalorder %s40, %s41
    %p52 = scmp.eq.s32.totalorder %s20, 0
    %p53 = por %p51, %p52
    %p54 = scmp.ne.s32.totalorder %s40, %s41
    %p55 = scmp.eq.s32.totalorder %s21, 3
    %p56 = por %p54, %p55
    %p58 = scmp.ne.s32.totalorder %s41, %s57
    %p59 = scmp.eq.s32.totalorder %s21, 0
    %p60 = por %p58, %p59
    %s62 = sadd.s32 %s61, 1
    %p65 = scmp.eq.s32.totalorder %s15, 3
    %p66 = scmp.ne.s32.totalorder %s61, %s63
    %p67 = scmp.eq.s32.totalorder %s15, 0
    %p68 = por %p66, %p67
    %p69 = scmp.ne.s32.totalorder %s61, %s63
    %p70 = scmp.eq.s32.totalorder %s20, 3
    %p71 = por %p69, %p70
    %p72 = scmp.ne.s32.totalorder %s63, %s64
    %p73 = scmp.eq.s32.totalorder %s20, 0
    %p74 = por %p72, %p73
    %p75 = scmp.ne.s32.totalorder %s63, %s64
    %p76 = scmp.eq.s32.totalorder %s21, 3
    %p77 = por %p75, %p76
    %p79 = scmp.ne.s32.totalorder %s64, %s78
    %p80 = scmp.eq.s32.totalorder %s21, 0
    %p81 = por %p79, %p80
    %s83 = sadd.s32 %s82, 1
    %p86 = scmp.eq.s32.totalorder %s15, 3
    %p87 = scmp.ne.s32.totalorder %s82, %s84
    %p88 = scmp.eq.s32.totalorder %s15, 0
    %p89 = por %p87, %p88
    %p90 = scmp.ne.s32.totalorder %s82, %s84
    %p91 = scmp.eq.s32.totalorder %s20, 3
    %p92 = por %p90, %p91
    %p93 = scmp.ne.s32.totalorder %s84, %s85
    %p94 = scmp.eq.s32.totalorder %s20, 0
    %p95 = por %p93, %p94
    %p96 = scmp.ne.s32.totalorder %s84, %s85
    %p97 = scmp.eq.s32.totalorder %s21, 3
    %p98 = por %p96, %p97
    %p100 = scmp.ne.s32.totalorder %s85, %s99
    %p101 = scmp.eq.s32.totalorder %s21, 0
    %p102 = por %p100, %p101
    %s104 = sadd.s32 %s103, 1
    %p107 = scmp.eq.s32.totalorder %s15, 3
    %p108 = scmp.ne.s32.totalorder %s103, %s105
    %p109 = scmp.eq.s32.totalorder %s15, 0
    %p110 = por %p108, %p109
    %p111 = scmp.ne.s32.totalorder %s103, %s105
    %p112 = scmp.eq.s32.totalorder %s20, 3
    %p113 = por %p111, %p112
    %p114 = scmp.ne.s32.totalorder %s105, %s106
    %p115 = scmp.eq.s32.totalorder %s20, 0
    %p116 = por %p114, %p115
    %p117 = scmp.ne.s32.totalorder %s105, %s106
    %p118 = scmp.eq.s32.totalorder %s21, 3
    %p119 = por %p117, %p118
    %p121 = scmp.ne.s32.totalorder %s106, %s120
    %p122 = scmp.eq.s32.totalorder %s21, 0
    %p123 = por %p121, %p122
    %s125 = sadd.s32 %s124, 1
    %p128 = scmp.eq.s32.totalorder %s15, 3
    %p129 = scmp.ne.s32.totalorder %s124, %s126
    %p130 = scmp.eq.s32.totalorder %s15, 0
    %p131 = por %p129, %p130
    %p132 = scmp.ne.s32.totalorder %s124, %s126
    %p133 = scmp.eq.s32.totalorder %s20, 3
    %p134 = por %p132, %p133
    %p135 = scmp.ne.s32.totalorder %s126, %s127
    %p136 = scmp.eq.s32.totalorder %s20, 0
    %p137 = por %p135, %p136
    %p138 = scmp.ne.s32.totalorder %s126, %s127
    %p139 = scmp.eq.s32.totalorder %s21, 3
    %p140 = por %p138, %p139
    %p142 = scmp.ne.s32.totalorder %s127, %s141
    %p143 = scmp.eq.s32.totalorder %s21, 0
    %p144 = por %p142, %p143
    %s146 = sadd.s32 %s145, 1
    %p149 = scmp.eq.s32.totalorder %s15, 3
    %p150 = scmp.ne.s32.totalorder %s145, %s147
    %p151 = scmp.eq.s32.totalorder %s15, 0
    %p152 = por %p150, %p151
    %p153 = scmp.ne.s32.totalorder %s145, %s147
    %p154 = scmp.eq.s32.totalorder %s20, 3
    %p155 = por %p153, %p154
    %p156 = scmp.ne.s32.totalorder %s147, %s148
    %p157 = scmp.eq.s32.totalorder %s20, 0
    %p158 = por %p156, %p157
    %p159 = scmp.ne.s32.totalorder %s147, %s148
    %p160 = scmp.eq.s32.totalorder %s21, 3
    %p161 = por %p159, %p160
    %p163 = scmp.ne.s32.totalorder %s148, %s162
    %p164 = scmp.eq.s32.totalorder %s21, 0
    %p165 = por %p163, %p164
    %s167 = sadd.s32 %s166, 1
    %p170 = scmp.eq.s32.totalorder %s15, 3
    %p171 = scmp.ne.s32.totalorder %s166, %s168
    %p172 = scmp.eq.s32.totalorder %s15, 0
    %p173 = por %p171, %p172
    %p174 = scmp.ne.s32.totalorder %s166, %s168
    %p175 = scmp.eq.s32.totalorder %s20, 3
    %p176 = por %p174, %p175
    %p177 = scmp.ne.s32.totalorder %s168, %s169
    %p178 = scmp.eq.s32.totalorder %s20, 0
    %p179 = por %p177, %p178
    %p180 = scmp.ne.s32.totalorder %s168, %s169
    %p181 = scmp.eq.s32.totalorder %s21, 3
    %p182 = por %p180, %p181
    %p184 = scmp.ne.s32.totalorder %s169, %s183
    %p185 = scmp.eq.s32.totalorder %s21, 0
    %p186 = por %p184, %p185
    %s188 = sadd.s32 %s187, 1
    %p191 = scmp.eq.s32.totalorder %s15, 3
    %p192 = scmp.ne.s32.totalorder %s187, %s189
    %p193 = scmp.eq.s32.totalorder %s15, 0
    %p194 = por %p192, %p193
    %p195 = scmp.ne.s32.totalorder %s187, %s189
    %p196 = scmp.eq.s32.totalorder %s20, 3
    %p197 = por %p195, %p196
    %p198 = scmp.ne.s32.totalorder %s189, %s190
    %p199 = scmp.eq.s32.totalorder %s20, 0
    %p200 = por %p198, %p199
    %p201 = scmp.ne.s32.totalorder %s189, %s190
    %p202 = scmp.eq.s32.totalorder %s21, 3
    %p203 = por %p201, %p202
    %p205 = scmp.ne.s32.totalorder %s190, %s204
    %p206 = scmp.eq.s32.totalorder %s21, 0
    %p207 = por %p205, %p206
    %s209 = sadd.s32 %s208, 1
    %p212 = scmp.eq.s32.totalorder %s15, 3
    %p213 = scmp.ne.s32.totalorder %s208, %s210
    %p214 = scmp.eq.s32.totalorder %s15, 0
    %p215 = por %p213, %p214
    %p216 = scmp.ne.s32.totalorder %s208, %s210
    %p217 = scmp.eq.s32.totalorder %s20, 3
    %p218 = por %p216, %p217
    %p219 = scmp.ne.s32.totalorder %s210, %s211
    %p220 = scmp.eq.s32.totalorder %s20, 0
    %p221 = por %p219, %p220
    %p222 = scmp.ne.s32.totalorder %s210, %s211
    %p223 = scmp.eq.s32.totalorder %s21, 3
    %p224 = por %p222, %p223
    %p226 = scmp.ne.s32.totalorder %s211, %s225
    %p227 = scmp.eq.s32.totalorder %s21, 0
    %p228 = por %p226, %p227
    %s229 = ssub.s32 %s22, %s34
    %p230 = scmp.eq.s32.totalorder %s229, 0
    %s232 = sadd.s32 %s231, 1
    %s233 = scalar_select %p230, %s231, %s232
    %p236 = pneg %p230
    %p237 = scmp.eq.s32.totalorder %s15, 3
    %p238 = por %p236, %p237
    %p239 = scmp.ne.s32.totalorder %s231, %s234
    %p240 = scmp.eq.s32.totalorder %s15, 0
    %p241 = por %p239, %p240
    %p242 = scmp.ne.s32.totalorder %s231, %s234
    %p243 = scmp.eq.s32.totalorder %s20, 3
    %p244 = por %p242, %p243
    %p245 = scmp.ne.s32.totalorder %s234, %s235
    %p246 = scmp.eq.s32.totalorder %s20, 0
    %p247 = por %p245, %p246
    %p248 = scmp.ne.s32.totalorder %s234, %s235
    %p249 = scmp.eq.s32.totalorder %s21, 3
    %p250 = por %p248, %p249
    %p252 = scmp.ne.s32.totalorder %s235, %s251
    %p253 = scmp.eq.s32.totalorder %s21, 0
    %p254 = por %p252, %p253
    %p255 = scmp.le.s32.totalorder 1, %s15
    %p256 = scmp.lt.s32.totalorder %s15, 5
    %p257 = pnand %p255, %p256
    %p258 = pneg %p257
    // Predicated region
    $region9: #{encoder_stage_forward.1} parent=5 // pred_check
      _
    $region10: #{encoder_stage_forward.1} parent=5 // pred_check_branch
      %260 = sbr.rel (%p257) target = $region12
    $region11: #{encoder_stage_forward.1} parent=5 // pred_region
      %s261 = ssub.s32 %s15, 1
      // Predicated region
      $region13: #{encoder_stage_forward.1} parent=11 // pred_check
        %p262 = pneg %p74
      $region14: #{encoder_stage_forward.1} parent=11 // pred_check_branch
        %264 = sbr.rel (%p262) target = $region16
      $region15: #{encoder_stage_forward.1} parent=11 // pred_region
        _
      $region16: #{encoder_stage_forward.1} parent=11 // pred_fallthru
        _
      // Predicated region
      $region17: #{encoder_stage_forward.1} parent=11 // pred_check
        %p265 = pneg %p95
      $region18: #{encoder_stage_forward.1} parent=11 // pred_check_branch
        %267 = sbr.rel (%p265) target = $region20
      $region19: #{encoder_stage_forward.1} parent=11 // pred_region
        _
      $region20: #{encoder_stage_forward.1} parent=11 // pred_fallthru
        _
      // Predicated region
      $region21: #{encoder_stage_forward.1} parent=11 // pred_check
        %p268 = pneg %p116
      $region22: #{encoder_stage_forward.1} parent=11 // pred_check_branch
        %270 = sbr.rel (%p268) target = $region24
      $region23: #{encoder_stage_forward.1} parent=11 // pred_region
        _
      $region24: #{encoder_stage_forward.1} parent=11 // pred_fallthru
        _
      // Predicated region
      $region25: #{encoder_stage_forward.1} parent=11 // pred_check
        %p271 = pneg %p137
      $region26: #{encoder_stage_forward.1} parent=11 // pred_check_branch
        %273 = sbr.rel (%p271) target = $region28
      $region27: #{encoder_stage_forward.1} parent=11 // pred_region
        _
      $region28: #{encoder_stage_forward.1} parent=11 // pred_fallthru
        _
      // Predicated region
      $region29: #{encoder_stage_forward.1} parent=11 // pred_check
        %p274 = pneg %p158
      $region30: #{encoder_stage_forward.1} parent=11 // pred_check_branch
        %276 = sbr.rel (%p274) target = $region32
      $region31: #{encoder_stage_forward.1} parent=11 // pred_region
        _
      $region32: #{encoder_stage_forward.1} parent=11 // pred_fallthru
        _
      // Predicated region
      $region33: #{encoder_stage_forward.1} parent=11 // pred_check
        %p277 = pneg %p179
      $region34: #{encoder_stage_forward.1} parent=11 // pred_check_branch
        %279 = sbr.rel (%p277) target = $region36
      $region35: #{encoder_stage_forward.1} parent=11 // pred_region
        _
      $region36: #{encoder_stage_forward.1} parent=11 // pred_fallthru
        _
      // Predicated region
      $region37: #{encoder_stage_forward.1} parent=11 // pred_check
        %p280 = pneg %p200
      $region38: #{encoder_stage_forward.1} parent=11 // pred_check_branch
        %282 = sbr.rel (%p280) target = $region40
      $region39: #{encoder_stage_forward.1} parent=11 // pred_region
        _
      $region40: #{encoder_stage_forward.1} parent=11 // pred_fallthru
        _
      // Predicated region
      $region41: #{encoder_stage_forward.1} parent=11 // pred_check
        %p283 = pneg %p221
      $region42: #{encoder_stage_forward.1} parent=11 // pred_check_branch
        %285 = sbr.rel (%p283) target = $region44
      $region43: #{encoder_stage_forward.1} parent=11 // pred_region
        _
      $region44: #{encoder_stage_forward.1} parent=11 // pred_fallthru
        _
    $region12: #{encoder_stage_forward.1} parent=5 // pred_fallthru
      _
    %p286 = scmp.lt.s32.totalorder %s15, 4
    // Predicated region
    $region45: #{encoder_stage_forward.1} parent=5 // pred_check
      %p287 = pneg %p286
    $region46: #{encoder_stage_forward.1} parent=5 // pred_check_branch
      %289 = sbr.rel (%p287) target = $region48
    $region47: #{encoder_stage_forward.1} parent=5 // pred_region
      // Predicated region
      $region49: #{encoder_stage_forward.1} parent=47 // pred_check
        %p290 = pneg %p47
      $region50: #{encoder_stage_forward.1} parent=47 // pred_check_branch
        %292 = sbr.rel (%p290) target = $region52
      $region51: #{encoder_stage_forward.1} parent=47 // pred_region
        %s293 = smul.u32 2, %s22
        %p294 = scmp.lt.s32.totalorder %s293, 3
        %s295 = scalar_select %p294, %s293, 3
        %s296 = smul.addr %s295, 5
        %s297 = smul.addr %s296, 8
        %s298 = scalar_lea.vmem %s0, %s297
        %s299 = smul.u32 2, %s22
      $region52: #{encoder_stage_forward.1} parent=47 // pred_fallthru
        _
    $region48: #{encoder_stage_forward.1} parent=5 // pred_fallthru
      _
    %p300 = scmp.le.s32.totalorder 1, %s15
    %p301 = scmp.lt.s32.totalorder %s15, 5
    %p302 = pnand %p300, %p301
    %p303 = pneg %p302
    // Predicated region
    $region53: #{encoder_stage_forward.1} parent=5 // pred_check
      _
    $region54: #{encoder_stage_forward.1} parent=5 // pred_check_branch
      %305 = sbr.rel (%p302) target = $region56
    $region55: #{encoder_stage_forward.1} parent=5 // pred_region
      %s306 = ssub.s32 %s15, 1
      %s307 = smul.u32 2, %s24
      %p308 = scmp.lt.s32.totalorder %s307, 3
      %s309 = scalar_select %p308, %s307, 3
      %s310 = smul.addr %s309, 5
      %s311 = smul.addr %s310, 8
      %s312 = scalar_lea.vmem %s0, %s311
      %p313 = pneg %p53
      %p314 = pneg %p50
      %p315 = pneg %p74
      %p316 = pneg %p71
      %p317 = pneg %p95
      %p318 = pneg %p92
      %p319 = pneg %p116
      %p320 = pneg %p113
      %p321 = pneg %p137
      %p322 = pneg %p134
      %p323 = pneg %p158
      %p324 = pneg %p155
      %p325 = pneg %p179
      %p326 = pneg %p176
      %p327 = pneg %p200
      %p328 = pneg %p197
      %p329 = pneg %p221
      %p330 = pneg %p218
      %p331 = pneg %p247
      %p332 = pneg %p244
      %s333 = smul.u32 2, %s24
      %p334 = scmp.lt.s32.totalorder %s333, 3
      %s335 = scalar_select %p334, %s333, 3
      %s336 = smul.addr %s335, 4
      %s337 = smul.addr %s336, 8
      %s338 = scalar_lea.vmem %s9, %s337
      %s339 = smul.u32 2, %s24
      %p340 = scmp.lt.s32.totalorder %s339, 3
      %s341 = scalar_select %p340, %s339, 3
      %s342 = smul.addr %s341, 5
      %s343 = smul.addr %s342, 8
      %s344 = scalar_lea.vmem %s0, %s343
      %s345 = smul.u32 2, %s24
      %s346 = smul.u32 2, %s24
      %p347 = scmp.lt.s32.totalorder %s346, 3
      %s348 = scalar_select %p347, %s346, 3
      %s349 = smul.addr %s348, 4
      %s350 = smul.addr %s349, 8
      %s351 = scalar_lea.vmem %s9, %s350
      %s352 = smul.u32 2, %s24
      %p353 = scmp.eq.s32.totalorder %s25, 0
      // Predicated region
      $region57: #{encoder_stage_forward.1} parent=55 // pred_check
        %p354 = pneg %p353
      $region58: #{encoder_stage_forward.1} parent=55 // pred_check_branch
        %356 = sbr.rel (%p354) target = $region60
      $region59: #{encoder_stage_forward.1} parent=55 // pred_region
        %v357 = vld [vmem:[%s344] sm:$0xff]
        %v358 = vld [vmem:[%s344 + $0x8] sm:$0xff]
        %v359 = vld [vmem:[%s344 + $0x10] sm:$0xff]
        %v360 = vld [vmem:[%s344 + $0x18] sm:$0xff]
        %v361 = vld [vmem:[%s344 + $0x28] sm:$0xff]
        %v362 = vld [vmem:[%s344 + $0x30] sm:$0xff]
        %v363 = vld [vmem:[%s344 + $0x38] sm:$0xff]
        %v364 = vld [vmem:[%s344 + $0x40] sm:$0xff]
        %v365 = vld [vmem:[%s344 + $0x1] sm:$0xff]
        %v366 = vld [vmem:[%s344 + $0x9] sm:$0xff]
        %v367 = vld [vmem:[%s344 + $0x11] sm:$0xff]
        %v368 = vld [vmem:[%s344 + $0x19] sm:$0xff]
        %v369 = vld [vmem:[%s344 + $0x29] sm:$0xff]
        %v370 = vld [vmem:[%s344 + $0x31] sm:$0xff]
        %v371 = vld [vmem:[%s344 + $0x39] sm:$0xff]
        %v372 = vld [vmem:[%s344 + $0x41] sm:$0xff]
        %v373 = vld [vmem:[%s1] sm:$0xff]
        %v374 = vld [vmem:[%s1 + $0x8] sm:$0xff]
        %v375 = vld [vmem:[%s1 + $0x10] sm:$0xff]
        %v376 = vld [vmem:[%s1 + $0x18] sm:$0xff]
        %v377 = vld [vmem:[%s1 + $0x20] sm:$0xff]
        %v378 = vld [vmem:[%s1 + $0x28] sm:$0xff]
        %v379 = vld [vmem:[%s1 + $0x30] sm:$0xff]
        %v380 = vld [vmem:[%s1 + $0x38] sm:$0xff]
        %v381 = vld [vmem:[%s1 + $0x40] sm:$0xff]
        %v382 = vld [vmem:[%s1 + $0x48] sm:$0xff]
        %v383 = vld [vmem:[%s1 + $0x50] sm:$0xff]
        %v384 = vld [vmem:[%s1 + $0x58] sm:$0xff]
        %v385 = vld [vmem:[%s1 + $0x60] sm:$0xff]
        %v386 = vld [vmem:[%s1 + $0x68] sm:$0xff]
        %v387 = vld [vmem:[%s1 + $0x70] sm:$0xff]
        %v388 = vld [vmem:[%s1 + $0x78] sm:$0xff]
        %s389 = scalar_lea.vmem %s1, 128
        %v390 = vld [vmem:[%s389] sm:$0xff]
        %v391 = vld [vmem:[%s389 + $0x8] sm:$0xff]
        %v392 = vld [vmem:[%s389 + $0x10] sm:$0xff]
        %v393 = vld [vmem:[%s389 + $0x18] sm:$0xff]
        %v394 = vld [vmem:[%s389 + $0x20] sm:$0xff]
        %v395 = vld [vmem:[%s389 + $0x28] sm:$0xff]
        %v396 = vld [vmem:[%s389 + $0x30] sm:$0xff]
        %v397 = vld [vmem:[%s389 + $0x38] sm:$0xff]
        %v398 = vld [vmem:[%s389 + $0x40] sm:$0xff]
        %v399 = vld [vmem:[%s389 + $0x48] sm:$0xff]
        %v400 = vld [vmem:[%s389 + $0x50] sm:$0xff]
        %v401 = vld [vmem:[%s389 + $0x58] sm:$0xff]
        %v402 = vld [vmem:[%s389 + $0x60] sm:$0xff]
        %v403 = vld [vmem:[%s389 + $0x68] sm:$0xff]
        %v404 = vld [vmem:[%s389 + $0x70] sm:$0xff]
        %v405 = vld [vmem:[%s389 + $0x78] sm:$0xff]
        %406 = vmatprep.subr.mxu0 0.0
        %407 = vmatpush1.msra.mxu0 %v405
        %408 = vmatprep.subr.mxu0 0.0
        %409 = vmatpush1.msra.mxu0 %v404
        %410 = vmatprep.subr.mxu0 0.0
        %411 = vmatpush1.msra.mxu0 %v403
        %412 = vmatprep.subr.mxu0 0.0
        %413 = vmatpush1.msra.mxu0 %v402
        %414 = vmatprep.subr.mxu0 0.0
        %415 = vmatpush1.msra.mxu0 %v401
        %416 = vmatprep.subr.mxu0 0.0
        %417 = vmatpush1.msra.mxu0 %v400
        %418 = vmatprep.subr.mxu0 0.0
        %419 = vmatpush1.msra.mxu0 %v399
        %420 = vmatprep.subr.mxu0 0.0
        %421 = vmatpush1.msra.mxu0 %v398
        %422 = vmatprep.subr.mxu0 0.0
        %423 = vmatpush1.msra.mxu0 %v397
        %424 = vmatprep.subr.mxu0 0.0
        %425 = vmatpush1.msra.mxu0 %v396
        %426 = vmatprep.subr.mxu0 0.0
        %427 = vmatpush1.msra.mxu0 %v395
        %428 = vmatprep.subr.mxu0 0.0
        %429 = vmatpush1.msra.mxu0 %v394
        %430 = vmatprep.subr.mxu0 0.0
        %431 = vmatpush1.msra.mxu0 %v393
        %432 = vmatprep.subr.mxu0 0.0
        %433 = vmatpush1.msra.mxu0 %v392
        %434 = vmatprep.subr.mxu0 0.0
        %435 = vmatpush1.msra.mxu0 %v391
        %436 = vmatprep.subr.mxu0 0.0
        %437 = vmatpush1.msra.mxu0 %v390
        %438 = vmatprep.subr.mxu0 0.0
        %439 = vmatpush2.msra.mxu0 0.0
        %440 = vmatprep.subr.mxu0 0.0
        %441 = vmatpush2.msra.mxu0 0.0
        %442 = vmatprep.subr.mxu0 0.0
        %443 = vmatpush2.msra.mxu0 0.0
        %444 = vmatprep.subr.mxu0 0.0
        %445 = vmatpush2.msra.mxu0 0.0
        %446 = vmatprep.subr.mxu0 0.0
        %447 = vmatpush2.msra.mxu0 0.0
        %448 = vmatprep.subr.mxu0 0.0
        %449 = vmatpush2.msra.mxu0 0.0
        %450 = vmatprep.subr.mxu0 0.0
        %451 = vmatpush2.msra.mxu0 0.0
        %452 = vmatprep.subr.mxu0 0.0
        %453 = vmatpush2.msra.mxu0 0.0
        %454 = vmatprep.subr.mxu0 0.0
        %455 = vmatpush2.msra.mxu0 0.0
        %456 = vmatprep.subr.mxu0 0.0
        %457 = vmatpush2.msra.mxu0 0.0
        %458 = vmatprep.subr.mxu0 0.0
        %459 = vmatpush2.msra.mxu0 0.0
        %460 = vmatprep.subr.mxu0 0.0
        %461 = vmatpush2.msra.mxu0 0.0
        %462 = vmatprep.subr.mxu0 0.0
        %463 = vmatpush2.msra.mxu0 0.0
        %464 = vmatprep.subr.mxu0 0.0
        %465 = vmatpush2.msra.mxu0 0.0
        %466 = vmatprep.subr.mxu0 0.0
        %467 = vmatpush2.msra.mxu0 0.0
        %468 = vmatprep.subr.mxu0 0.0
        %469 = vmatpush2.msra.mxu0 0.0
        %470 = vmatprep.mubr.f32.mxu0 0.0
        %471 = vmatmul.mubr.f32.gmra.mxu0 %v365
        %v472 = vpop.f32.mrf.mxu0
        %v473 = vadd.f32 0.0, %v472
        %v474 = vpop.f32.mrf.mxu0
        %475 = vmatprep.mubr.f32.mxu0 0.0
        %476 = vmatmul.mubr.f32.gmra.mxu0 %v366
        %v477 = vpop.f32.mrf.mxu0
        %v478 = vadd.f32 0.0, %v477
        %v479 = vpop.f32.mrf.mxu0
        %480 = vmatprep.mubr.f32.mxu0 0.0
        %481 = vmatmul.mubr.f32.gmra.mxu0 %v367
        %v482 = vpop.f32.mrf.mxu0
        %v483 = vadd.f32 0.0, %v482
        %v484 = vpop.f32.mrf.mxu0
        %485 = vmatprep.mubr.f32.mxu0 0.0
        %486 = vmatmul.mubr.f32.gmra.mxu0 %v368
        %v487 = vpop.f32.mrf.mxu0
        %v488 = vadd.f32 0.0, %v487
        %v489 = vpop.f32.mrf.mxu0
        %490 = vmatprep.mubr.f32.mxu0 0.0
        %491 = vmatmul.mubr.f32.gmra.mxu0 %v369
        %v492 = vpop.f32.mrf.mxu0
        %v493 = vadd.f32 0.0, %v492
        %v494 = vpop.f32.mrf.mxu0
        %495 = vmatprep.mubr.f32.mxu0 0.0
        %496 = vmatmul.mubr.f32.gmra.mxu0 %v370
        %v497 = vpop.f32.mrf.mxu0
        %v498 = vadd.f32 0.0, %v497
        %v499 = vpop.f32.mrf.mxu0
        %500 = vmatprep.mubr.f32.mxu0 0.0
        %501 = vmatmul.mubr.f32.gmra.mxu0 %v371
        %v502 = vpop.f32.mrf.mxu0
        %v503 = vadd.f32 0.0, %v502
        %v504 = vpop.f32.mrf.mxu0
        %505 = vmatprep.mubr.f32.mxu0 0.0
        %506 = vmatmul.mubr.f32.gmra.mxu0 %v372
        %v507 = vpop.f32.mrf.mxu0
        %v508 = vadd.f32 0.0, %v507
        %v509 = vpop.f32.mrf.mxu0
        %510 = vdwg.mxu0
        %511 = vmatprep.subr.mxu0 0.0
        %512 = vmatpush1.msra.mxu0 %v388
        %513 = vmatprep.subr.mxu0 0.0
        %514 = vmatpush1.msra.mxu0 %v387
        %515 = vmatprep.subr.mxu0 0.0
        %516 = vmatpush1.msra.mxu0 %v386
        %517 = vmatprep.subr.mxu0 0.0
        %518 = vmatpush1.msra.mxu0 %v385
        %519 = vmatprep.subr.mxu0 0.0
        %520 = vmatpush1.msra.mxu0 %v384
        %521 = vmatprep.subr.mxu0 0.0
        %522 = vmatpush1.msra.mxu0 %v383
        %523 = vmatprep.subr.mxu0 0.0
        %524 = vmatpush1.msra.mxu0 %v382
        %525 = vmatprep.subr.mxu0 0.0
        %526 = vmatpush1.msra.mxu0 %v381
        %527 = vmatprep.subr.mxu0 0.0
        %528 = vmatpush1.msra.mxu0 %v380
        %529 = vmatprep.subr.mxu0 0.0
        %530 = vmatpush1.msra.mxu0 %v379
        %531 = vmatprep.subr.mxu0 0.0
        %532 = vmatpush1.msra.mxu0 %v378
        %533 = vmatprep.subr.mxu0 0.0
        %534 = vmatpush1.msra.mxu0 %v377
        %535 = vmatprep.subr.mxu0 0.0
        %536 = vmatpush1.msra.mxu0 %v376
        %537 = vmatprep.subr.mxu0 0.0
        %538 = vmatpush1.msra.mxu0 %v375
        %539 = vmatprep.subr.mxu0 0.0
        %540 = vmatpush1.msra.mxu0 %v374
        %541 = vmatprep.subr.mxu0 0.0
        %542 = vmatpush1.msra.mxu0 %v373
        %543 = vmatprep.subr.mxu0 0.0
        %544 = vmatpush2.msra.mxu0 0.0
        %545 = vmatprep.subr.mxu0 0.0
        %546 = vmatpush2.msra.mxu0 0.0
        %547 = vmatprep.subr.mxu0 0.0
        %548 = vmatpush2.msra.mxu0 0.0
        %549 = vmatprep.subr.mxu0 0.0
        %550 = vmatpush2.msra.mxu0 0.0
        %551 = vmatprep.subr.mxu0 0.0
        %552 = vmatpush2.msra.mxu0 0.0
        %553 = vmatprep.subr.mxu0 0.0
        %554 = vmatpush2.msra.mxu0 0.0
        %555 = vmatprep.subr.mxu0 0.0
        %556 = vmatpush2.msra.mxu0 0.0
        %557 = vmatprep.subr.mxu0 0.0
        %558 = vmatpush2.msra.mxu0 0.0
        %559 = vmatprep.subr.mxu0 0.0
        %560 = vmatpush2.msra.mxu0 0.0
        %561 = vmatprep.subr.mxu0 0.0
        %562 = vmatpush2.msra.mxu0 0.0
        %563 = vmatprep.subr.mxu0 0.0
        %564 = vmatpush2.msra.mxu0 0.0
        %565 = vmatprep.subr.mxu0 0.0
        %566 = vmatpush2.msra.mxu0 0.0
        %567 = vmatprep.subr.mxu0 0.0
        %568 = vmatpush2.msra.mxu0 0.0
        %569 = vmatprep.subr.mxu0 0.0
        %570 = vmatpush2.msra.mxu0 0.0
        %571 = vmatprep.subr.mxu0 0.0
        %572 = vmatpush2.msra.mxu0 0.0
        %573 = vmatprep.subr.mxu0 0.0
        %574 = vmatpush2.msra.mxu0 0.0
        %575 = vmatprep.mubr.f32.mxu0 0.0
        %576 = vmatmul.mubr.f32.gmra.mxu0 %v357
        %v577 = vpop.f32.mrf.mxu0
        %v578 = vadd.f32 %v473, %v577
        %v579 = vpop.f32.mrf.mxu0
        %580 = vmatprep.mubr.f32.mxu0 0.0
        %581 = vmatmul.mubr.f32.gmra.mxu0 %v358
        %v582 = vpop.f32.mrf.mxu0
        %v583 = vadd.f32 %v478, %v582
        %v584 = vpop.f32.mrf.mxu0
        %585 = vmatprep.mubr.f32.mxu0 0.0
        %586 = vmatmul.mubr.f32.gmra.mxu0 %v359
        %v587 = vpop.f32.mrf.mxu0
        %v588 = vadd.f32 %v483, %v587
        %v589 = vpop.f32.mrf.mxu0
        %590 = vmatprep.mubr.f32.mxu0 0.0
        %591 = vmatmul.mubr.f32.gmra.mxu0 %v360
        %v592 = vpop.f32.mrf.mxu0
        %v593 = vadd.f32 %v488, %v592
        %v594 = vpop.f32.mrf.mxu0
        %595 = vmatprep.mubr.f32.mxu0 0.0
        %596 = vmatmul.mubr.f32.gmra.mxu0 %v361
        %v597 = vpop.f32.mrf.mxu0
        %v598 = vadd.f32 %v493, %v597
        %v599 = vpop.f32.mrf.mxu0
        %600 = vmatprep.mubr.f32.mxu0 0.0
        %601 = vmatmul.mubr.f32.gmra.mxu0 %v362
        %v602 = vpop.f32.mrf.mxu0
        %v603 = vadd.f32 %v498, %v602
        %v604 = vpop.f32.mrf.mxu0
        %605 = vmatprep.mubr.f32.mxu0 0.0
        %606 = vmatmul.mubr.f32.gmra.mxu0 %v363
        %v607 = vpop.f32.mrf.mxu0
        %v608 = vadd.f32 %v503, %v607
        %v609 = vpop.f32.mrf.mxu0
        %610 = vmatprep.mubr.f32.mxu0 0.0
        %611 = vmatmul.mubr.f32.gmra.mxu0 %v364
        %v612 = vpop.f32.mrf.mxu0
        %v613 = vadd.f32 %v508, %v612
        %v614 = vpop.f32.mrf.mxu0
        %615 = vdwg.mxu0
        %v616 = vld [vmem:[%s2] sm:$0x1]
        %v618 = vlaneseq
        %v619 = vshrl.u32 %v618, 7
        %v620 = vsub.s32 0, %v619
        %v621 = vrot.slane %v616, %v620
        %v623 = vadd.f32 %v578, %v621
        %v624 = vadd.f32 %v583, %v621
        %v625 = vadd.f32 %v588, %v621
        %v626 = vadd.f32 %v593, %v621
        %v627 = vadd.f32 %v598, %v621
        %v628 = vadd.f32 %v603, %v621
        %v629 = vadd.f32 %v608, %v621
        %v630 = vadd.f32 %v613, %v621
        %631 = vst [vmem:[%s351] sm:$0xff] %v623
        %632 = vst [vmem:[%s351 + $0x8] sm:$0xff] %v624
        %633 = vst [vmem:[%s351 + $0x10] sm:$0xff] %v625
        %634 = vst [vmem:[%s351 + $0x18] sm:$0xff] %v626
        %635 = vst [vmem:[%s351 + $0x20] sm:$0xff] %v627
        %636 = vst [vmem:[%s351 + $0x28] sm:$0xff] %v628
        %637 = vst [vmem:[%s351 + $0x30] sm:$0xff] %v629
        %638 = vst [vmem:[%s351 + $0x38] sm:$0xff] %v630
        %639 = vst [vmem:[#allocation2] sm:$0xff] 0.0
        %640 = vst [vmem:[#allocation2 + $0x30] sm:$0xff] 0.0
        %641 = vst [vmem:[#allocation2 + $0x28] sm:$0xff] 0.0
        %642 = vst [vmem:[#allocation2 + $0x58] sm:$0xff] 0.0
      $region60: #{encoder_stage_forward.1} parent=55 // pred_fallthru
        _
      %s643 = smul.u32 %s25, 2
      %s644 = scalar_lea.vmem %s4, %s643
      %v645 = vld [vmem:[%s644] sm:$0x1]
      %s646 = smul.u32 %s643, 4
      %s647 = scalar_lea.vmem %s5, %s646
      %v648 = vld [vmem:[%s647] sm:$0x7]
      %s649 = scalar_lea.vmem %s6, %s643
      %v650 = vld [vmem:[%s649] sm:$0x1]
      %s651 = scalar_lea.vmem %s8, %s643
      %v652 = vld [vmem:[%s651] sm:$0x1]
      %v653 = vld [vmem:[%s351] sm:$0xff]
      %v654 = vld [vmem:[%s351 + $0x8] sm:$0xff]
      %v655 = vld [vmem:[%s351 + $0x10] sm:$0xff]
      %v656 = vld [vmem:[%s351 + $0x18] sm:$0xff]
      %v657 = vld [vmem:[%s351 + $0x20] sm:$0xff]
      %v658 = vld [vmem:[%s351 + $0x28] sm:$0xff]
      %v659 = vld [vmem:[%s351 + $0x30] sm:$0xff]
      %v660 = vld [vmem:[%s351 + $0x38] sm:$0xff]
      %s661 = smul.u32 %s643, 128
      %s662 = scalar_lea.vmem %s3, %s661
      %v663 = vld [vmem:[%s662] sm:$0xff]
      %v664 = vld [vmem:[%s662 + $0x8] sm:$0xff]
      %v665 = vld [vmem:[%s662 + $0x10] sm:$0xff]
      %v666 = vld [vmem:[%s662 + $0x18] sm:$0xff]
      %v667 = vld [vmem:[%s662 + $0x20] sm:$0xff]
      %v668 = vld [vmem:[%s662 + $0x28] sm:$0xff]
      %v669 = vld [vmem:[%s662 + $0x30] sm:$0xff]
      %v670 = vld [vmem:[%s662 + $0x38] sm:$0xff]
      %v671 = vld [vmem:[%s662 + $0x40] sm:$0xff]
      %v672 = vld [vmem:[%s662 + $0x48] sm:$0xff]
      %v673 = vld [vmem:[%s662 + $0x50] sm:$0xff]
      %v674 = vld [vmem:[%s662 + $0x58] sm:$0xff]
      %v675 = vld [vmem:[%s662 + $0x60] sm:$0xff]
      %v676 = vld [vmem:[%s662 + $0x68] sm:$0xff]
      %v677 = vld [vmem:[%s662 + $0x70] sm:$0xff]
      %v678 = vld [vmem:[%s662 + $0x78] sm:$0xff]
      %v680 = vlaneseq
      %v681 = vshrl.u32 %v680, 7
      %v682 = vsub.s32 0, %v681
      %v683 = vrot.slane %v645, %v682
      %685 = vmatprep.subr.mxu0 0.0
      %686 = vmatpush1.msra.mxu0 %v678
      %687 = vmatprep.subr.mxu0 0.0
      %688 = vmatpush1.msra.mxu0 %v677
      %689 = vmatprep.subr.mxu0 0.0
      %690 = vmatpush1.msra.mxu0 %v676
      %691 = vmatprep.subr.mxu0 0.0
      %692 = vmatpush1.msra.mxu0 %v675
      %693 = vmatprep.subr.mxu0 0.0
      %694 = vmatpush1.msra.mxu0 %v674
      %695 = vmatprep.subr.mxu0 0.0
      %696 = vmatpush1.msra.mxu0 %v673
      %697 = vmatprep.subr.mxu0 0.0
      %698 = vmatpush1.msra.mxu0 %v672
      %699 = vmatprep.subr.mxu0 0.0
      %700 = vmatpush1.msra.mxu0 %v671
      %701 = vmatprep.subr.mxu0 0.0
      %702 = vmatpush1.msra.mxu0 %v670
      %703 = vmatprep.subr.mxu0 0.0
      %704 = vmatpush1.msra.mxu0 %v669
      %705 = vmatprep.subr.mxu0 0.0
      %706 = vmatpush1.msra.mxu0 %v668
      %707 = vmatprep.subr.mxu0 0.0
      %708 = vmatpush1.msra.mxu0 %v667
      %709 = vmatprep.subr.mxu0 0.0
      %710 = vmatpush1.msra.mxu0 %v666
      %711 = vmatprep.subr.mxu0 0.0
      %712 = vmatpush1.msra.mxu0 %v665
      %713 = vmatprep.subr.mxu0 0.0
      %714 = vmatpush1.msra.mxu0 %v664
      %715 = vmatprep.subr.mxu0 0.0
      %716 = vmatpush1.msra.mxu0 %v663
      %717 = vmatprep.subr.mxu0 0.0
      %718 = vmatpush2.msra.mxu0 0.0
      %719 = vmatprep.subr.mxu0 0.0
      %720 = vmatpush2.msra.mxu0 0.0
      %721 = vmatprep.subr.mxu0 0.0
      %722 = vmatpush2.msra.mxu0 0.0
      %723 = vmatprep.subr.mxu0 0.0
      %724 = vmatpush2.msra.mxu0 0.0
      %725 = vmatprep.subr.mxu0 0.0
      %726 = vmatpush2.msra.mxu0 0.0
      %727 = vmatprep.subr.mxu0 0.0
      %728 = vmatpush2.msra.mxu0 0.0
      %729 = vmatprep.subr.mxu0 0.0
      %730 = vmatpush2.msra.mxu0 0.0
      %731 = vmatprep.subr.mxu0 0.0
      %732 = vmatpush2.msra.mxu0 0.0
      %733 = vmatprep.subr.mxu0 0.0
      %734 = vmatpush2.msra.mxu0 0.0
      %735 = vmatprep.subr.mxu0 0.0
      %736 = vmatpush2.msra.mxu0 0.0
      %737 = vmatprep.subr.mxu0 0.0
      %738 = vmatpush2.msra.mxu0 0.0
      %739 = vmatprep.subr.mxu0 0.0
      %740 = vmatpush2.msra.mxu0 0.0
      %741 = vmatprep.subr.mxu0 0.0
      %742 = vmatpush2.msra.mxu0 0.0
      %743 = vmatprep.subr.mxu0 0.0
      %744 = vmatpush2.msra.mxu0 0.0
      %745 = vmatprep.subr.mxu0 0.0
      %746 = vmatpush2.msra.mxu0 0.0
      %747 = vmatprep.subr.mxu0 0.0
      %748 = vmatpush2.msra.mxu0 0.0
      %749 = vmatprep.mubr.f32.mxu0 0.0
      %750 = vmatmul.mubr.f32.gmra.mxu0 %v653
      %v751 = vpop.f32.mrf.mxu0
      %v752 = vadd.f32 %v683, %v751
      %v753 = vpop.f32.mrf.mxu0
      %754 = vmatprep.mubr.f32.mxu0 0.0
      %755 = vmatmul.mubr.f32.gmra.mxu0 %v654
      %v756 = vpop.f32.mrf.mxu0
      %v757 = vadd.f32 %v683, %v756
      %v758 = vpop.f32.mrf.mxu0
      %759 = vmatprep.mubr.f32.mxu0 0.0
      %760 = vmatmul.mubr.f32.gmra.mxu0 %v655
      %v761 = vpop.f32.mrf.mxu0
      %v762 = vadd.f32 %v683, %v761
      %v763 = vpop.f32.mrf.mxu0
      %764 = vmatprep.mubr.f32.mxu0 0.0
      %765 = vmatmul.mubr.f32.gmra.mxu0 %v656
      %v766 = vpop.f32.mrf.mxu0
      %v767 = vadd.f32 %v683, %v766
      %v768 = vpop.f32.mrf.mxu0
      %769 = vmatprep.mubr.f32.mxu0 0.0
      %770 = vmatmul.mubr.f32.gmra.mxu0 %v657
      %v771 = vpop.f32.mrf.mxu0
      %v772 = vadd.f32 %v683, %v771
      %v773 = vpop.f32.mrf.mxu0
      %774 = vmatprep.mubr.f32.mxu0 0.0
      %775 = vmatmul.mubr.f32.gmra.mxu0 %v658
      %v776 = vpop.f32.mrf.mxu0
      %v777 = vadd.f32 %v683, %v776
      %v778 = vpop.f32.mrf.mxu0
      %779 = vmatprep.mubr.f32.mxu0 0.0
      %780 = vmatmul.mubr.f32.gmra.mxu0 %v659
      %v781 = vpop.f32.mrf.mxu0
      %v782 = vadd.f32 %v683, %v781
      %v783 = vpop.f32.mrf.mxu0
      %784 = vmatprep.mubr.f32.mxu0 0.0
      %785 = vmatmul.mubr.f32.gmra.mxu0 %v660
      %v786 = vpop.f32.mrf.mxu0
      %v787 = vadd.f32 %v683, %v786
      %v788 = vpop.f32.mrf.mxu0
      %789 = vdwg.mxu0
      %v790 = vxor.u32 %v752, 2147483648
      %v791 = vxor.u32 %v757, 2147483648
      %v792 = vxor.u32 %v762, 2147483648
      %v793 = vxor.u32 %v767, 2147483648
      %v794 = vxor.u32 %v772, 2147483648
      %v795 = vxor.u32 %v777, 2147483648
      %v796 = vxor.u32 %v782, 2147483648
      %v797 = vxor.u32 %v787, 2147483648
      %v798 = vmul.f32 %v790, 1.442695
      %v799 = vpow.pop %v798
      %v800 = vmul.f32 %v791, 1.442695
      %v801 = vpow.pop %v800
      %v802 = vmul.f32 %v792, 1.442695
      %v803 = vpow.pop %v802
      %v804 = vmul.f32 %v793, 1.442695
      %v805 = vpow.pop %v804
      %v806 = vmul.f32 %v794, 1.442695
      %v807 = vpow.pop %v806
      %v808 = vmul.f32 %v795, 1.442695
      %v809 = vpow.pop %v808
      %v810 = vmul.f32 %v796, 1.442695
      %v811 = vpow.pop %v810
      %v812 = vmul.f32 %v797, 1.442695
      %v813 = vpow.pop %v812
      %v814 = vadd.f32 %v799, 1.0
      %v815 = vadd.f32 %v801, 1.0
      %v816 = vadd.f32 %v803, 1.0
      %v817 = vadd.f32 %v805, 1.0
      %v818 = vadd.f32 %v807, 1.0
      %v819 = vadd.f32 %v809, 1.0
      %v820 = vadd.f32 %v811, 1.0
      %v821 = vadd.f32 %v813, 1.0
      %v822 = vrcp.pop %v814
      %v823 = vmul.f32 1.0, %v822
      %v824 = vrcp.pop %v815
      %v825 = vmul.f32 1.0, %v824
      %v826 = vrcp.pop %v816
      %v827 = vmul.f32 1.0, %v826
      %v828 = vrcp.pop %v817
      %v829 = vmul.f32 1.0, %v828
      %v830 = vrcp.pop %v818
      %v831 = vmul.f32 1.0, %v830
      %v832 = vrcp.pop %v819
      %v833 = vmul.f32 1.0, %v832
      %v834 = vrcp.pop %v820
      %v835 = vmul.f32 1.0, %v834
      %v836 = vrcp.pop %v821
      %v837 = vmul.f32 1.0, %v836
      %v838 = vmul.f32 %v752, %v823
      %v839 = vmul.f32 %v757, %v825
      %v840 = vmul.f32 %v762, %v827
      %v841 = vmul.f32 %v767, %v829
      %v842 = vmul.f32 %v772, %v831
      %v843 = vmul.f32 %v777, %v833
      %v844 = vmul.f32 %v782, %v835
      %v845 = vmul.f32 %v787, %v837
      %846 = vst [vmem:[#allocation2 + $0x8] sm:$0xff] %v838
      %847 = vst [vmem:[#allocation2 + $0x10] sm:$0xff] %v839
      %848 = vst [vmem:[#allocation2 + $0x18] sm:$0xff] %v840
      %849 = vst [vmem:[#allocation2 + $0x20] sm:$0xff] %v841
      %850 = vst [vmem:[#allocation2 + $0x38] sm:$0xff] %v842
      %851 = vst [vmem:[#allocation2 + $0x40] sm:$0xff] %v843
      %852 = vst [vmem:[#allocation2 + $0x48] sm:$0xff] %v844
      %853 = vst [vmem:[#allocation2 + $0x50] sm:$0xff] %v845
      %v854 = vld [vmem:[#allocation2] sm:$0xff]
      %v855 = vld [vmem:[#allocation2 + $0x8] sm:$0xff]
      %v856 = vld [vmem:[#allocation2 + $0x10] sm:$0xff]
      %v857 = vld [vmem:[#allocation2 + $0x18] sm:$0xff]
      %v858 = vld [vmem:[#allocation2 + $0x20] sm:$0xff]
      %v859 = vld [vmem:[#allocation2 + $0x28] sm:$0xff]
      %v860 = vld [vmem:[#allocation2 + $0x30] sm:$0xff]
      %v861 = vld [vmem:[#allocation2 + $0x38] sm:$0xff]
      %v862 = vld [vmem:[#allocation2 + $0x40] sm:$0xff]
      %v863 = vld [vmem:[#allocation2 + $0x48] sm:$0xff]
      %v864 = vld [vmem:[#allocation2 + $0x50] sm:$0xff]
      %v865 = vld [vmem:[#allocation2 + $0x58] sm:$0xff]
      %v866 = vlaneseq
      %v867 = vshrl.u32 %v866, 7
      %v868 = vsub.s32 0, %v867
      %v869 = vrot.slane %v648, %v868
      %v870 = vmul.f32 %v854, %v869
      %v871 = vmul.f32 %v855, %v869
      %v872 = vmul.f32 %v856, %v869
      %v873 = vmul.f32 %v857, %v869
      %v874 = vmul.f32 %v858, %v869
      %v875 = vmul.f32 %v860, %v869
      %v876 = vmul.f32 %v861, %v869
      %v877 = vmul.f32 %v862, %v869
      %v878 = vmul.f32 %v863, %v869
      %v879 = vmul.f32 %v864, %v869
      %v880 = vlaneseq
      %v881 = vshrl.u32 %v880, 7
      %v882 = vsub.s32 1, %v881
      %v883 = vrot.slane %v648, %v882
      %v884 = vmul.f32 %v855, %v883
      %v885 = vmul.f32 %v856, %v883
      %v886 = vmul.f32 %v857, %v883
      %v887 = vmul.f32 %v858, %v883
      %v888 = vmul.f32 %v861, %v883
      %v889 = vmul.f32 %v862, %v883
      %v890 = vmul.f32 %v863, %v883
      %v891 = vmul.f32 %v864, %v883
      %vm900 = vcmask 1046528
      %v901 = vrot.slane %v884, 1
      %v902 = vrot.slane %v885, 1
      %v903 = vsel %vm900, %v901, %v902
      %v904 = vrot.slane %v886, 1
      %v905 = vsel %vm900, %v902, %v904
      %v906 = vrot.slane %v887, 1
      %v907 = vsel %vm900, %v904, %v906
      %v908 = vrot.slane %v888, 1
      %v909 = vrot.slane %v889, 1
      %v910 = vsel %vm900, %v908, %v909
      %v911 = vrot.slane %v890, 1
      %v912 = vsel %vm900, %v909, %v911
      %v913 = vrot.slane %v891, 1
      %v914 = vsel %vm900, %v911, %v913
      %v925 = vadd.f32 %v870, %v901
      %v926 = vadd.f32 %v871, %v903
      %v927 = vadd.f32 %v872, %v905
      %v928 = vadd.f32 %v873, %v907
      %v929 = vadd.f32 %v874, %v906
      %v930 = vadd.f32 %v875, %v908
      %v931 = vadd.f32 %v876, %v910
      %v932 = vadd.f32 %v877, %v912
      %v933 = vadd.f32 %v878, %v914
      %v934 = vadd.f32 %v879, %v913
      %v935 = vlaneseq
      %v936 = vshrl.u32 %v935, 7
      %v937 = vsub.s32 2, %v936
      %v938 = vrot.slane %v648, %v937
      %v939 = vmul.f32 %v855, %v938
      %v940 = vmul.f32 %v856, %v938
      %v941 = vmul.f32 %v857, %v938
      %v942 = vmul.f32 %v858, %v938
      %v943 = vmul.f32 %v859, %v938
      %v944 = vmul.f32 %v861, %v938
      %v945 = vmul.f32 %v862, %v938
      %v946 = vmul.f32 %v863, %v938
      %v947 = vmul.f32 %v864, %v938
      %v948 = vmul.f32 %v865, %v938
      %vm959 = vcmask 1045504
      %v960 = vrot.slane %v939, 2
      %v961 = vrot.slane %v940, 2
      %v962 = vsel %vm959, %v960, %v961
      %v963 = vrot.slane %v941, 2
      %v964 = vsel %vm959, %v961, %v963
      %v965 = vrot.slane %v942, 2
      %v966 = vsel %vm959, %v963, %v965
      %v967 = vrot.slane %v943, 2
      %v968 = vsel %vm959, %v965, %v967
      %v969 = vrot.slane %v944, 2
      %v970 = vrot.slane %v945, 2
      %v971 = vsel %vm959, %v969, %v970
      %v972 = vrot.slane %v946, 2
      %v973 = vsel %vm959, %v970, %v972
      %v974 = vrot.slane %v947, 2
      %v975 = vsel %vm959, %v972, %v974
      %v976 = vrot.slane %v948, 2
      %v977 = vsel %vm959, %v974, %v976
      %v988 = vadd.f32 %v925, %v960
      %v989 = vadd.f32 %v926, %v962
      %v990 = vadd.f32 %v927, %v964
      %v991 = vadd.f32 %v928, %v966
      %v992 = vadd.f32 %v929, %v968
      %v993 = vadd.f32 %v930, %v969
      %v994 = vadd.f32 %v931, %v971
      %v995 = vadd.f32 %v932, %v973
      %v996 = vadd.f32 %v933, %v975
      %v997 = vadd.f32 %v934, %v977
      %v999 = vlaneseq
      %v1000 = vshrl.u32 %v999, 7
      %v1001 = vsub.s32 0, %v1000
      %v1002 = vrot.slane %v650, %v1001
      %v1004 = vadd.f32 %v988, %v1002
      %v1005 = vadd.f32 %v989, %v1002
      %v1006 = vadd.f32 %v990, %v1002
      %v1007 = vadd.f32 %v991, %v1002
      %v1008 = vadd.f32 %v992, %v1002
      %v1009 = vadd.f32 %v993, %v1002
      %v1010 = vadd.f32 %v994, %v1002
      %v1011 = vadd.f32 %v995, %v1002
      %v1012 = vadd.f32 %v996, %v1002
      %v1013 = vadd.f32 %v997, %v1002
      %v1014 = vxor.u32 %v1004, 2147483648
      %v1015 = vxor.u32 %v1005, 2147483648
      %v1016 = vxor.u32 %v1006, 2147483648
      %v1017 = vxor.u32 %v1007, 2147483648
      %v1018 = vxor.u32 %v1008, 2147483648
      %v1019 = vxor.u32 %v1009, 2147483648
      %v1020 = vxor.u32 %v1010, 2147483648
      %v1021 = vxor.u32 %v1011, 2147483648
      %v1022 = vxor.u32 %v1012, 2147483648
      %v1023 = vxor.u32 %v1013, 2147483648
      %v1024 = vmul.f32 %v1014, 1.442695
      %v1025 = vpow.pop %v1024
      %v1026 = vmul.f32 %v1015, 1.442695
      %v1027 = vpow.pop %v1026
      %v1028 = vmul.f32 %v1016, 1.442695
      %v1029 = vpow.pop %v1028
      %v1030 = vmul.f32 %v1017, 1.442695
      %v1031 = vpow.pop %v1030
      %v1032 = vmul.f32 %v1018, 1.442695
      %v1033 = vpow.pop %v1032
      %v1034 = vmul.f32 %v1019, 1.442695
      %v1035 = vpow.pop %v1034
      %v1036 = vmul.f32 %v1020, 1.442695
      %v1037 = vpow.pop %v1036
      %v1038 = vmul.f32 %v1021, 1.442695
      %v1039 = vpow.pop %v1038
      %v1040 = vmul.f32 %v1022, 1.442695
      %v1041 = vpow.pop %v1040
      %v1042 = vmul.f32 %v1023, 1.442695
      %v1043 = vpow.pop %v1042
      %v1044 = vadd.f32 %v1025, 1.0
      %v1045 = vadd.f32 %v1027, 1.0
      %v1046 = vadd.f32 %v1029, 1.0
      %v1047 = vadd.f32 %v1031, 1.0
      %v1048 = vadd.f32 %v1033, 1.0
      %v1049 = vadd.f32 %v1035, 1.0
      %v1050 = vadd.f32 %v1037, 1.0
      %v1051 = vadd.f32 %v1039, 1.0
      %v1052 = vadd.f32 %v1041, 1.0
      %v1053 = vadd.f32 %v1043, 1.0
      %v1054 = vrcp.pop %v1044
      %v1055 = vmul.f32 1.0, %v1054
      %v1056 = vrcp.pop %v1045
      %v1057 = vmul.f32 1.0, %v1056
      %v1058 = vrcp.pop %v1046
      %v1059 = vmul.f32 1.0, %v1058
      %v1060 = vrcp.pop %v1047
      %v1061 = vmul.f32 1.0, %v1060
      %v1062 = vrcp.pop %v1048
      %v1063 = vmul.f32 1.0, %v1062
      %v1064 = vrcp.pop %v1049
      %v1065 = vmul.f32 1.0, %v1064
      %v1066 = vrcp.pop %v1050
      %v1067 = vmul.f32 1.0, %v1066
      %v1068 = vrcp.pop %v1051
      %v1069 = vmul.f32 1.0, %v1068
      %v1070 = vrcp.pop %v1052
      %v1071 = vmul.f32 1.0, %v1070
      %v1072 = vrcp.pop %v1053
      %v1073 = vmul.f32 1.0, %v1072
      %v1074 = vmul.f32 %v1004, %v1055
      %v1075 = vmul.f32 %v1005, %v1057
      %v1076 = vmul.f32 %v1006, %v1059
      %v1077 = vmul.f32 %v1007, %v1061
      %v1078 = vmul.f32 %v1008, %v1063
      %v1079 = vmul.f32 %v1009, %v1065
      %v1080 = vmul.f32 %v1010, %v1067
      %v1081 = vmul.f32 %v1011, %v1069
      %v1082 = vmul.f32 %v1012, %v1071
      %v1083 = vmul.f32 %v1013, %v1073
      %vm1094 = vcmask 1040384
      %v1095 = vrot.slane %v1074, 7
      %v1096 = vrot.slane %v1075, 7
      %v1097 = vsel %vm1094, %v1095, %v1096
      %v1098 = vrot.slane %v1076, 7
      %v1099 = vsel %vm1094, %v1096, %v1098
      %v1100 = vrot.slane %v1077, 7
      %v1101 = vsel %vm1094, %v1098, %v1100
      %v1102 = vrot.slane %v1078, 7
      %v1103 = vsel %vm1094, %v1100, %v1102
      %v1104 = vrot.slane %v1079, 7
      %v1105 = vrot.slane %v1080, 7
      %v1106 = vsel %vm1094, %v1104, %v1105
      %v1107 = vrot.slane %v1081, 7
      %v1108 = vsel %vm1094, %v1105, %v1107
      %v1109 = vrot.slane %v1082, 7
      %v1110 = vsel %vm1094, %v1107, %v1109
      %v1111 = vrot.slane %v1083, 7
      %v1112 = vsel %vm1094, %v1109, %v1111
      %s1121 = scalar_lea.vmem %s7, %s661
      %v1122 = vld [vmem:[%s1121] sm:$0xff]
      %v1123 = vld [vmem:[%s1121 + $0x8] sm:$0xff]
      %v1124 = vld [vmem:[%s1121 + $0x10] sm:$0xff]
      %v1125 = vld [vmem:[%s1121 + $0x18] sm:$0xff]
      %v1126 = vld [vmem:[%s1121 + $0x20] sm:$0xff]
      %v1127 = vld [vmem:[%s1121 + $0x28] sm:$0xff]
      %v1128 = vld [vmem:[%s1121 + $0x30] sm:$0xff]
      %v1129 = vld [vmem:[%s1121 + $0x38] sm:$0xff]
      %v1130 = vld [vmem:[%s1121 + $0x40] sm:$0xff]
      %v1131 = vld [vmem:[%s1121 + $0x48] sm:$0xff]
      %v1132 = vld [vmem:[%s1121 + $0x50] sm:$0xff]
      %v1133 = vld [vmem:[%s1121 + $0x58] sm:$0xff]
      %v1134 = vld [vmem:[%s1121 + $0x60] sm:$0xff]
      %v1135 = vld [vmem:[%s1121 + $0x68] sm:$0xff]
      %v1136 = vld [vmem:[%s1121 + $0x70] sm:$0xff]
      %v1137 = vld [vmem:[%s1121 + $0x78] sm:$0xff]
      %v1139 = vlaneseq
      %v1140 = vshrl.u32 %v1139, 7
      %v1141 = vsub.s32 0, %v1140
      %v1142 = vrot.slane %v652, %v1141
      %1144 = vmatprep.subr.mxu0 0.0
      %1145 = vmatpush1.msra.mxu0 %v1137
      %1146 = vmatprep.subr.mxu0 0.0
      %1147 = vmatpush1.msra.mxu0 %v1136
      %1148 = vmatprep.subr.mxu0 0.0
      %1149 = vmatpush1.msra.mxu0 %v1135
      %1150 = vmatprep.subr.mxu0 0.0
      %1151 = vmatpush1.msra.mxu0 %v1134
      %1152 = vmatprep.subr.mxu0 0.0
      %1153 = vmatpush1.msra.mxu0 %v1133
      %1154 = vmatprep.subr.mxu0 0.0
      %1155 = vmatpush1.msra.mxu0 %v1132
      %1156 = vmatprep.subr.mxu0 0.0
      %1157 = vmatpush1.msra.mxu0 %v1131
      %1158 = vmatprep.subr.mxu0 0.0
      %1159 = vmatpush1.msra.mxu0 %v1130
      %1160 = vmatprep.subr.mxu0 0.0
      %1161 = vmatpush1.msra.mxu0 %v1129
      %1162 = vmatprep.subr.mxu0 0.0
      %1163 = vmatpush1.msra.mxu0 %v1128
      %1164 = vmatprep.subr.mxu0 0.0
      %1165 = vmatpush1.msra.mxu0 %v1127
      %1166 = vmatprep.subr.mxu0 0.0
      %1167 = vmatpush1.msra.mxu0 %v1126
      %1168 = vmatprep.subr.mxu0 0.0
      %1169 = vmatpush1.msra.mxu0 %v1125
      %1170 = vmatprep.subr.mxu0 0.0
      %1171 = vmatpush1.msra.mxu0 %v1124
      %1172 = vmatprep.subr.mxu0 0.0
      %1173 = vmatpush1.msra.mxu0 %v1123
      %1174 = vmatprep.subr.mxu0 0.0
      %1175 = vmatpush1.msra.mxu0 %v1122
      %1176 = vmatprep.subr.mxu0 0.0
      %1177 = vmatpush2.msra.mxu0 0.0
      %1178 = vmatprep.subr.mxu0 0.0
      %1179 = vmatpush2.msra.mxu0 0.0
      %1180 = vmatprep.subr.mxu0 0.0
      %1181 = vmatpush2.msra.mxu0 0.0
      %1182 = vmatprep.subr.mxu0 0.0
      %1183 = vmatpush2.msra.mxu0 0.0
      %1184 = vmatprep.subr.mxu0 0.0
      %1185 = vmatpush2.msra.mxu0 0.0
      %1186 = vmatprep.subr.mxu0 0.0
      %1187 = vmatpush2.msra.mxu0 0.0
      %1188 = vmatprep.subr.mxu0 0.0
      %1189 = vmatpush2.msra.mxu0 0.0
      %1190 = vmatprep.subr.mxu0 0.0
      %1191 = vmatpush2.msra.mxu0 0.0
      %1192 = vmatprep.subr.mxu0 0.0
      %1193 = vmatpush2.msra.mxu0 0.0
      %1194 = vmatprep.subr.mxu0 0.0
      %1195 = vmatpush2.msra.mxu0 0.0
      %1196 = vmatprep.subr.mxu0 0.0
      %1197 = vmatpush2.msra.mxu0 0.0
      %1198 = vmatprep.subr.mxu0 0.0
      %1199 = vmatpush2.msra.mxu0 0.0
      %1200 = vmatprep.subr.mxu0 0.0
      %1201 = vmatpush2.msra.mxu0 0.0
      %1202 = vmatprep.subr.mxu0 0.0
      %1203 = vmatpush2.msra.mxu0 0.0
      %1204 = vmatprep.subr.mxu0 0.0
      %1205 = vmatpush2.msra.mxu0 0.0
      %1206 = vmatprep.subr.mxu0 0.0
      %1207 = vmatpush2.msra.mxu0 0.0
      %1208 = vmatprep.mubr.f32.mxu0 0.0
      %1209 = vmatmul.mubr.f32.gmra.mxu0 %v1097
      %v1210 = vpop.f32.mrf.mxu0
      %v1211 = vadd.f32 %v1142, %v1210
      %v1212 = vpop.f32.mrf.mxu0
      %1213 = vmatprep.mubr.f32.mxu0 0.0
      %1214 = vmatmul.mubr.f32.gmra.mxu0 %v1099
      %v1215 = vpop.f32.mrf.mxu0
      %v1216 = vadd.f32 %v1142, %v1215
      %v1217 = vpop.f32.mrf.mxu0
      %1218 = vmatprep.mubr.f32.mxu0 0.0
      %1219 = vmatmul.mubr.f32.gmra.mxu0 %v1101
      %v1220 = vpop.f32.mrf.mxu0
      %v1221 = vadd.f32 %v1142, %v1220
      %v1222 = vpop.f32.mrf.mxu0
      %1223 = vmatprep.mubr.f32.mxu0 0.0
      %1224 = vmatmul.mubr.f32.gmra.mxu0 %v1103
      %v1225 = vpop.f32.mrf.mxu0
      %v1226 = vadd.f32 %v1142, %v1225
      %v1227 = vpop.f32.mrf.mxu0
      %1228 = vmatprep.mubr.f32.mxu0 0.0
      %1229 = vmatmul.mubr.f32.gmra.mxu0 %v1106
      %v1230 = vpop.f32.mrf.mxu0
      %v1231 = vadd.f32 %v1142, %v1230
      %v1232 = vpop.f32.mrf.mxu0
      %1233 = vmatprep.mubr.f32.mxu0 0.0
      %1234 = vmatmul.mubr.f32.gmra.mxu0 %v1108
      %v1235 = vpop.f32.mrf.mxu0
      %v1236 = vadd.f32 %v1142, %v1235
      %v1237 = vpop.f32.mrf.mxu0
      %1238 = vmatprep.mubr.f32.mxu0 0.0
      %1239 = vmatmul.mubr.f32.gmra.mxu0 %v1110
      %v1240 = vpop.f32.mrf.mxu0
      %v1241 = vadd.f32 %v1142, %v1240
      %v1242 = vpop.f32.mrf.mxu0
      %1243 = vmatprep.mubr.f32.mxu0 0.0
      %1244 = vmatmul.mubr.f32.gmra.mxu0 %v1112
      %v1245 = vpop.f32.mrf.mxu0
      %v1246 = vadd.f32 %v1142, %v1245
      %v1247 = vpop.f32.mrf.mxu0
      %1248 = vdwg.mxu0
      %v1249 = vld [vmem:[%s351] sm:$0xff]
      %v1250 = vld [vmem:[%s351 + $0x8] sm:$0xff]
      %v1251 = vld [vmem:[%s351 + $0x10] sm:$0xff]
      %v1252 = vld [vmem:[%s351 + $0x18] sm:$0xff]
      %v1253 = vld [vmem:[%s351 + $0x20] sm:$0xff]
      %v1254 = vld [vmem:[%s351 + $0x28] sm:$0xff]
      %v1255 = vld [vmem:[%s351 + $0x30] sm:$0xff]
      %v1256 = vld [vmem:[%s351 + $0x38] sm:$0xff]
      %v1257 = vadd.f32 %v1211, %v1249
      %v1258 = vadd.f32 %v1216, %v1250
      %v1259 = vadd.f32 %v1221, %v1251
      %v1260 = vadd.f32 %v1226, %v1252
      %v1261 = vadd.f32 %v1231, %v1253
      %v1262 = vadd.f32 %v1236, %v1254
      %v1263 = vadd.f32 %v1241, %v1255
      %v1264 = vadd.f32 %v1246, %v1256
      %1265 = vst [vmem:[%s351] sm:$0xff] %v1257
      %1266 = vst [vmem:[%s351 + $0x8] sm:$0xff] %v1258
      %1267 = vst [vmem:[%s351 + $0x10] sm:$0xff] %v1259
      %1268 = vst [vmem:[%s351 + $0x18] sm:$0xff] %v1260
      %1269 = vst [vmem:[%s351 + $0x20] sm:$0xff] %v1261
      %1270 = vst [vmem:[%s351 + $0x28] sm:$0xff] %v1262
      %1271 = vst [vmem:[%s351 + $0x30] sm:$0xff] %v1263
      %1272 = vst [vmem:[%s351 + $0x38] sm:$0xff] %v1264
      %s1273 = sadd.s32 %s643, 1
      %s1274 = scalar_lea.vmem %s4, %s1273
      %v1275 = vld [vmem:[%s1274] sm:$0x1]
      %s1276 = smul.u32 %s1273, 4
      %s1277 = scalar_lea.vmem %s5, %s1276
      %v1278 = vld [vmem:[%s1277] sm:$0x7]
      %s1279 = scalar_lea.vmem %s6, %s1273
      %v1280 = vld [vmem:[%s1279] sm:$0x1]
      %s1281 = scalar_lea.vmem %s8, %s1273
      %v1282 = vld [vmem:[%s1281] sm:$0x1]
      %v1283 = vld [vmem:[%s351] sm:$0xff]
      %v1284 = vld [vmem:[%s351 + $0x8] sm:$0xff]
      %v1285 = vld [vmem:[%s351 + $0x10] sm:$0xff]
      %v1286 = vld [vmem:[%s351 + $0x18] sm:$0xff]
      %v1287 = vld [vmem:[%s351 + $0x20] sm:$0xff]
      %v1288 = vld [vmem:[%s351 + $0x28] sm:$0xff]
      %v1289 = vld [vmem:[%s351 + $0x30] sm:$0xff]
      %v1290 = vld [vmem:[%s351 + $0x38] sm:$0xff]
      %s1291 = smul.u32 %s1273, 128
      %s1292 = scalar_lea.vmem %s3, %s1291
      %v1293 = vld [vmem:[%s1292] sm:$0xff]
      %v1294 = vld [vmem:[%s1292 + $0x8] sm:$0xff]
      %v1295 = vld [vmem:[%s1292 + $0x10] sm:$0xff]
      %v1296 = vld [vmem:[%s1292 + $0x18] sm:$0xff]
      %v1297 = vld [vmem:[%s1292 + $0x20] sm:$0xff]
      %v1298 = vld [vmem:[%s1292 + $0x28] sm:$0xff]
      %v1299 = vld [vmem:[%s1292 + $0x30] sm:$0xff]
      %v1300 = vld [vmem:[%s1292 + $0x38] sm:$0xff]
      %v1301 = vld [vmem:[%s1292 + $0x40] sm:$0xff]
      %v1302 = vld [vmem:[%s1292 + $0x48] sm:$0xff]
      %v1303 = vld [vmem:[%s1292 + $0x50] sm:$0xff]
      %v1304 = vld [vmem:[%s1292 + $0x58] sm:$0xff]
      %v1305 = vld [vmem:[%s1292 + $0x60] sm:$0xff]
      %v1306 = vld [vmem:[%s1292 + $0x68] sm:$0xff]
      %v1307 = vld [vmem:[%s1292 + $0x70] sm:$0xff]
      %v1308 = vld [vmem:[%s1292 + $0x78] sm:$0xff]
      %v1310 = vlaneseq
      %v1311 = vshrl.u32 %v1310, 7
      %v1312 = vsub.s32 0, %v1311
      %v1313 = vrot.slane %v1275, %v1312
      %1315 = vmatprep.subr.mxu0 0.0
      %1316 = vmatpush1.msra.mxu0 %v1308
      %1317 = vmatprep.subr.mxu0 0.0
      %1318 = vmatpush1.msra.mxu0 %v1307
      %1319 = vmatprep.subr.mxu0 0.0
      %1320 = vmatpush1.msra.mxu0 %v1306
      %1321 = vmatprep.subr.mxu0 0.0
      %1322 = vmatpush1.msra.mxu0 %v1305
      %1323 = vmatprep.subr.mxu0 0.0
      %1324 = vmatpush1.msra.mxu0 %v1304
      %1325 = vmatprep.subr.mxu0 0.0
      %1326 = vmatpush1.msra.mxu0 %v1303
      %1327 = vmatprep.subr.mxu0 0.0
      %1328 = vmatpush1.msra.mxu0 %v1302
      %1329 = vmatprep.subr.mxu0 0.0
      %1330 = vmatpush1.msra.mxu0 %v1301
      %1331 = vmatprep.subr.mxu0 0.0
      %1332 = vmatpush1.msra.mxu0 %v1300
      %1333 = vmatprep.subr.mxu0 0.0
      %1334 = vmatpush1.msra.mxu0 %v1299
      %1335 = vmatprep.subr.mxu0 0.0
      %1336 = vmatpush1.msra.mxu0 %v1298
      %1337 = vmatprep.subr.mxu0 0.0
      %1338 = vmatpush1.msra.mxu0 %v1297
      %1339 = vmatprep.subr.mxu0 0.0
      %1340 = vmatpush1.msra.mxu0 %v1296
      %1341 = vmatprep.subr.mxu0 0.0
      %1342 = vmatpush1.msra.mxu0 %v1295
      %1343 = vmatprep.subr.mxu0 0.0
      %1344 = vmatpush1.msra.mxu0 %v1294
      %1345 = vmatprep.subr.mxu0 0.0
      %1346 = vmatpush1.msra.mxu0 %v1293
      %1347 = vmatprep.subr.mxu0 0.0
      %1348 = vmatpush2.msra.mxu0 0.0
      %1349 = vmatprep.subr.mxu0 0.0
      %1350 = vmatpush2.msra.mxu0 0.0
      %1351 = vmatprep.subr.mxu0 0.0
      %1352 = vmatpush2.msra.mxu0 0.0
      %1353 = vmatprep.subr.mxu0 0.0
      %1354 = vmatpush2.msra.mxu0 0.0
      %1355 = vmatprep.subr.mxu0 0.0
      %1356 = vmatpush2.msra.mxu0 0.0
      %1357 = vmatprep.subr.mxu0 0.0
      %1358 = vmatpush2.msra.mxu0 0.0
      %1359 = vmatprep.subr.mxu0 0.0
      %1360 = vmatpush2.msra.mxu0 0.0
      %1361 = vmatprep.subr.mxu0 0.0
      %1362 = vmatpush2.msra.mxu0 0.0
      %1363 = vmatprep.subr.mxu0 0.0
      %1364 = vmatpush2.msra.mxu0 0.0
      %1365 = vmatprep.subr.mxu0 0.0
      %1366 = vmatpush2.msra.mxu0 0.0
      %1367 = vmatprep.subr.mxu0 0.0
      %1368 = vmatpush2.msra.mxu0 0.0
      %1369 = vmatprep.subr.mxu0 0.0
      %1370 = vmatpush2.msra.mxu0 0.0
      %1371 = vmatprep.subr.mxu0 0.0
      %1372 = vmatpush2.msra.mxu0 0.0
      %1373 = vmatprep.subr.mxu0 0.0
      %1374 = vmatpush2.msra.mxu0 0.0
      %1375 = vmatprep.subr.mxu0 0.0
      %1376 = vmatpush2.msra.mxu0 0.0
      %1377 = vmatprep.subr.mxu0 0.0
      %1378 = vmatpush2.msra.mxu0 0.0
      %1379 = vmatprep.mubr.f32.mxu0 0.0
      %1380 = vmatmul.mubr.f32.gmra.mxu0 %v1283
      %v1381 = vpop.f32.mrf.mxu0
      %v1382 = vadd.f32 %v1313, %v1381
      %v1383 = vpop.f32.mrf.mxu0
      %1384 = vmatprep.mubr.f32.mxu0 0.0
      %1385 = vmatmul.mubr.f32.gmra.mxu0 %v1284
      %v1386 = vpop.f32.mrf.mxu0
      %v1387 = vadd.f32 %v1313, %v1386
      %v1388 = vpop.f32.mrf.mxu0
      %1389 = vmatprep.mubr.f32.mxu0 0.0
      %1390 = vmatmul.mubr.f32.gmra.mxu0 %v1285
      %v1391 = vpop.f32.mrf.mxu0
      %v1392 = vadd.f32 %v1313, %v1391
      %v1393 = vpop.f32.mrf.mxu0
      %1394 = vmatprep.mubr.f32.mxu0 0.0
      %1395 = vmatmul.mubr.f32.gmra.mxu0 %v1286
      %v1396 = vpop.f32.mrf.mxu0
      %v1397 = vadd.f32 %v1313, %v1396
      %v1398 = vpop.f32.mrf.mxu0
      %1399 = vmatprep.mubr.f32.mxu0 0.0
      %1400 = vmatmul.mubr.f32.gmra.mxu0 %v1287
      %v1401 = vpop.f32.mrf.mxu0
      %v1402 = vadd.f32 %v1313, %v1401
      %v1403 = vpop.f32.mrf.mxu0
      %1404 = vmatprep.mubr.f32.mxu0 0.0
      %1405 = vmatmul.mubr.f32.gmra.mxu0 %v1288
      %v1406 = vpop.f32.mrf.mxu0
      %v1407 = vadd.f32 %v1313, %v1406
      %v1408 = vpop.f32.mrf.mxu0
      %1409 = vmatprep.mubr.f32.mxu0 0.0
      %1410 = vmatmul.mubr.f32.gmra.mxu0 %v1289
      %v1411 = vpop.f32.mrf.mxu0
      %v1412 = vadd.f32 %v1313, %v1411
      %v1413 = vpop.f32.mrf.mxu0
      %1414 = vmatprep.mubr.f32.mxu0 0.0
      %1415 = vmatmul.mubr.f32.gmra.mxu0 %v1290
      %v1416 = vpop.f32.mrf.mxu0
      %v1417 = vadd.f32 %v1313, %v1416
      %v1418 = vpop.f32.mrf.mxu0
      %1419 = vdwg.mxu0
      %v1420 = vxor.u32 %v1382, 2147483648
      %v1421 = vxor.u32 %v1387, 2147483648
      %v1422 = vxor.u32 %v1392, 2147483648
      %v1423 = vxor.u32 %v1397, 2147483648
      %v1424 = vxor.u32 %v1402, 2147483648
      %v1425 = vxor.u32 %v1407, 2147483648
      %v1426 = vxor.u32 %v1412, 2147483648
      %v1427 = vxor.u32 %v1417, 2147483648
      %v1428 = vmul.f32 %v1420, 1.442695
      %v1429 = vpow.pop %v1428
      %v1430 = vmul.f32 %v1421, 1.442695
      %v1431 = vpow.pop %v1430
      %v1432 = vmul.f32 %v1422, 1.442695
      %v1433 = vpow.pop %v1432
      %v1434 = vmul.f32 %v1423, 1.442695
      %v1435 = vpow.pop %v1434
      %v1436 = vmul.f32 %v1424, 1.442695
      %v1437 = vpow.pop %v1436
      %v1438 = vmul.f32 %v1425, 1.442695
      %v1439 = vpow.pop %v1438
      %v1440 = vmul.f32 %v1426, 1.442695
      %v1441 = vpow.pop %v1440
      %v1442 = vmul.f32 %v1427, 1.442695
      %v1443 = vpow.pop %v1442
      %v1444 = vadd.f32 %v1429, 1.0
      %v1445 = vadd.f32 %v1431, 1.0
      %v1446 = vadd.f32 %v1433, 1.0
      %v1447 = vadd.f32 %v1435, 1.0
      %v1448 = vadd.f32 %v1437, 1.0
      %v1449 = vadd.f32 %v1439, 1.0
      %v1450 = vadd.f32 %v1441, 1.0
      %v1451 = vadd.f32 %v1443, 1.0
      %v1452 = vrcp.pop %v1444
      %v1453 = vmul.f32 1.0, %v1452
      %v1454 = vrcp.pop %v1445
      %v1455 = vmul.f32 1.0, %v1454
      %v1456 = vrcp.pop %v1446
      %v1457 = vmul.f32 1.0, %v1456
      %v1458 = vrcp.pop %v1447
      %v1459 = vmul.f32 1.0, %v1458
      %v1460 = vrcp.pop %v1448
      %v1461 = vmul.f32 1.0, %v1460
      %v1462 = vrcp.pop %v1449
      %v1463 = vmul.f32 1.0, %v1462
      %v1464 = vrcp.pop %v1450
      %v1465 = vmul.f32 1.0, %v1464
      %v1466 = vrcp.pop %v1451
      %v1467 = vmul.f32 1.0, %v1466
      %v1468 = vmul.f32 %v1382, %v1453
      %v1469 = vmul.f32 %v1387, %v1455
      %v1470 = vmul.f32 %v1392, %v1457
      %v1471 = vmul.f32 %v1397, %v1459
      %v1472 = vmul.f32 %v1402, %v1461
      %v1473 = vmul.f32 %v1407, %v1463
      %v1474 = vmul.f32 %v1412, %v1465
      %v1475 = vmul.f32 %v1417, %v1467
      %1476 = vst [vmem:[#allocation2 + $0x8] sm:$0xff] %v1468
      %1477 = vst [vmem:[#allocation2 + $0x10] sm:$0xff] %v1469
      %1478 = vst [vmem:[#allocation2 + $0x18] sm:$0xff] %v1470
      %1479 = vst [vmem:[#allocation2 + $0x20] sm:$0xff] %v1471
      %1480 = vst [vmem:[#allocation2 + $0x38] sm:$0xff] %v1472
      %1481 = vst [vmem:[#allocation2 + $0x40] sm:$0xff] %v1473
      %1482 = vst [vmem:[#allocation2 + $0x48] sm:$0xff] %v1474
      %1483 = vst [vmem:[#allocation2 + $0x50] sm:$0xff] %v1475
      %v1484 = vld [vmem:[#allocation2] sm:$0xff]
      %v1485 = vld [vmem:[#allocation2 + $0x8] sm:$0xff]
      %v1486 = vld [vmem:[#allocation2 + $0x10] sm:$0xff]
      %v1487 = vld [vmem:[#allocation2 + $0x18] sm:$0xff]
      %v1488 = vld [vmem:[#allocation2 + $0x20] sm:$0xff]
      %v1489 = vld [vmem:[#allocation2 + $0x28] sm:$0xff]
      %v1490 = vld [vmem:[#allocation2 + $0x30] sm:$0xff]
      %v1491 = vld [vmem:[#allocation2 + $0x38] sm:$0xff]
      %v1492 = vld [vmem:[#allocation2 + $0x40] sm:$0xff]
      %v1493 = vld [vmem:[#allocation2 + $0x48] sm:$0xff]
      %v1494 = vld [vmem:[#allocation2 + $0x50] sm:$0xff]
      %v1495 = vld [vmem:[#allocation2 + $0x58] sm:$0xff]
      %v1496 = vlaneseq
      %v1497 = vshrl.u32 %v1496, 7
      %v1498 = vsub.s32 0, %v1497
      %v1499 = vrot.slane %v1278, %v1498
      %v1500 = vmul.f32 %v1484, %v1499
      %v1501 = vmul.f32 %v1485, %v1499
      %v1502 = vmul.f32 %v1486, %v1499
      %v1503 = vmul.f32 %v1487, %v1499
      %v1504 = vmul.f32 %v1488, %v1499
      %v1505 = vmul.f32 %v1490, %v1499
      %v1506 = vmul.f32 %v1491, %v1499
      %v1507 = vmul.f32 %v1492, %v1499
      %v1508 = vmul.f32 %v1493, %v1499
      %v1509 = vmul.f32 %v1494, %v1499
      %v1510 = vlaneseq
      %v1511 = vshrl.u32 %v1510, 7
      %v1512 = vsub.s32 1, %v1511
      %v1513 = vrot.slane %v1278, %v1512
      %v1514 = vmul.f32 %v1485, %v1513
      %v1515 = vmul.f32 %v1486, %v1513
      %v1516 = vmul.f32 %v1487, %v1513
      %v1517 = vmul.f32 %v1488, %v1513
      %v1518 = vmul.f32 %v1491, %v1513
      %v1519 = vmul.f32 %v1492, %v1513
      %v1520 = vmul.f32 %v1493, %v1513
      %v1521 = vmul.f32 %v1494, %v1513
      %v1530 = vrot.slane %v1514, 2
      %v1531 = vrot.slane %v1515, 2
      %v1532 = vsel %vm959, %v1530, %v1531
      %v1533 = vrot.slane %v1516, 2
      %v1534 = vsel %vm959, %v1531, %v1533
      %v1535 = vrot.slane %v1517, 2
      %v1536 = vsel %vm959, %v1533, %v1535
      %v1537 = vrot.slane %v1518, 2
      %v1538 = vrot.slane %v1519, 2
      %v1539 = vsel %vm959, %v1537, %v1538
      %v1540 = vrot.slane %v1520, 2
      %v1541 = vsel %vm959, %v1538, %v1540
      %v1542 = vrot.slane %v1521, 2
      %v1543 = vsel %vm959, %v1540, %v1542
      %v1554 = vadd.f32 %v1500, %v1530
      %v1555 = vadd.f32 %v1501, %v1532
      %v1556 = vadd.f32 %v1502, %v1534
      %v1557 = vadd.f32 %v1503, %v1536
      %v1558 = vadd.f32 %v1504, %v1535
      %v1559 = vadd.f32 %v1505, %v1537
      %v1560 = vadd.f32 %v1506, %v1539
      %v1561 = vadd.f32 %v1507, %v1541
      %v1562 = vadd.f32 %v1508, %v1543
      %v1563 = vadd.f32 %v1509, %v1542
      %v1564 = vlaneseq
      %v1565 = vshrl.u32 %v1564, 7
      %v1566 = vsub.s32 2, %v1565
      %v1567 = vrot.slane %v1278, %v1566
      %v1568 = vmul.f32 %v1485, %v1567
      %v1569 = vmul.f32 %v1486, %v1567
      %v1570 = vmul.f32 %v1487, %v1567
      %v1571 = vmul.f32 %v1488, %v1567
      %v1572 = vmul.f32 %v1489, %v1567
      %v1573 = vmul.f32 %v1491, %v1567
      %v1574 = vmul.f32 %v1492, %v1567
      %v1575 = vmul.f32 %v1493, %v1567
      %v1576 = vmul.f32 %v1494, %v1567
      %v1577 = vmul.f32 %v1495, %v1567
      %vm1588 = vcmask 1043456
      %v1589 = vrot.slane %v1568, 4
      %v1590 = vrot.slane %v1569, 4
      %v1591 = vsel %vm1588, %v1589, %v1590
      %v1592 = vrot.slane %v1570, 4
      %v1593 = vsel %vm1588, %v1590, %v1592
      %v1594 = vrot.slane %v1571, 4
      %v1595 = vsel %vm1588, %v1592, %v1594
      %v1596 = vrot.slane %v1572, 4
      %v1597 = vsel %vm1588, %v1594, %v1596
      %v1598 = vrot.slane %v1573, 4
      %v1599 = vrot.slane %v1574, 4
      %v1600 = vsel %vm1588, %v1598, %v1599
      %v1601 = vrot.slane %v1575, 4
      %v1602 = vsel %vm1588, %v1599, %v1601
      %v1603 = vrot.slane %v1576, 4
      %v1604 = vsel %vm1588, %v1601, %v1603
      %v1605 = vrot.slane %v1577, 4
      %v1606 = vsel %vm1588, %v1603, %v1605
      %v1617 = vadd.f32 %v1554, %v1589
      %v1618 = vadd.f32 %v1555, %v1591
      %v1619 = vadd.f32 %v1556, %v1593
      %v1620 = vadd.f32 %v1557, %v1595
      %v1621 = vadd.f32 %v1558, %v1597
      %v1622 = vadd.f32 %v1559, %v1598
      %v1623 = vadd.f32 %v1560, %v1600
      %v1624 = vadd.f32 %v1561, %v1602
      %v1625 = vadd.f32 %v1562, %v1604
      %v1626 = vadd.f32 %v1563, %v1606
      %v1628 = vlaneseq
      %v1629 = vshrl.u32 %v1628, 7
      %v1630 = vsub.s32 0, %v1629
      %v1631 = vrot.slane %v1280, %v1630
      %v1633 = vadd.f32 %v1617, %v1631
      %v1634 = vadd.f32 %v1618, %v1631
      %v1635 = vadd.f32 %v1619, %v1631
      %v1636 = vadd.f32 %v1620, %v1631
      %v1637 = vadd.f32 %v1621, %v1631
      %v1638 = vadd.f32 %v1622, %v1631
      %v1639 = vadd.f32 %v1623, %v1631
      %v1640 = vadd.f32 %v1624, %v1631
      %v1641 = vadd.f32 %v1625, %v1631
      %v1642 = vadd.f32 %v1626, %v1631
      %v1643 = vxor.u32 %v1633, 2147483648
      %v1644 = vxor.u32 %v1634, 2147483648
      %v1645 = vxor.u32 %v1635, 2147483648
      %v1646 = vxor.u32 %v1636, 2147483648
      %v1647 = vxor.u32 %v1637, 2147483648
      %v1648 = vxor.u32 %v1638, 2147483648
      %v1649 = vxor.u32 %v1639, 2147483648
      %v1650 = vxor.u32 %v1640, 2147483648
      %v1651 = vxor.u32 %v1641, 2147483648
      %v1652 = vxor.u32 %v1642, 2147483648
      %v1653 = vmul.f32 %v1643, 1.442695
      %v1654 = vpow.pop %v1653
      %v1655 = vmul.f32 %v1644, 1.442695
      %v1656 = vpow.pop %v1655
      %v1657 = vmul.f32 %v1645, 1.442695
      %v1658 = vpow.pop %v1657
      %v1659 = vmul.f32 %v1646, 1.442695
      %v1660 = vpow.pop %v1659
      %v1661 = vmul.f32 %v1647, 1.442695
      %v1662 = vpow.pop %v1661
      %v1663 = vmul.f32 %v1648, 1.442695
      %v1664 = vpow.pop %v1663
      %v1665 = vmul.f32 %v1649, 1.442695
      %v1666 = vpow.pop %v1665
      %v1667 = vmul.f32 %v1650, 1.442695
      %v1668 = vpow.pop %v1667
      %v1669 = vmul.f32 %v1651, 1.442695
      %v1670 = vpow.pop %v1669
      %v1671 = vmul.f32 %v1652, 1.442695
      %v1672 = vpow.pop %v1671
      %v1673 = vadd.f32 %v1654, 1.0
      %v1674 = vadd.f32 %v1656, 1.0
      %v1675 = vadd.f32 %v1658, 1.0
      %v1676 = vadd.f32 %v1660, 1.0
      %v1677 = vadd.f32 %v1662, 1.0
      %v1678 = vadd.f32 %v1664, 1.0
      %v1679 = vadd.f32 %v1666, 1.0
      %v1680 = vadd.f32 %v1668, 1.0
      %v1681 = vadd.f32 %v1670, 1.0
      %v1682 = vadd.f32 %v1672, 1.0
      %v1683 = vrcp.pop %v1673
      %v1684 = vmul.f32 1.0, %v1683
      %v1685 = vrcp.pop %v1674
      %v1686 = vmul.f32 1.0, %v1685
      %v1687 = vrcp.pop %v1675
      %v1688 = vmul.f32 1.0, %v1687
      %v1689 = vrcp.pop %v1676
      %v1690 = vmul.f32 1.0, %v1689
      %v1691 = vrcp.pop %v1677
      %v1692 = vmul.f32 1.0, %v1691
      %v1693 = vrcp.pop %v1678
      %v1694 = vmul.f32 1.0, %v1693
      %v1695 = vrcp.pop %v1679
      %v1696 = vmul.f32 1.0, %v1695
      %v1697 = vrcp.pop %v1680
      %v1698 = vmul.f32 1.0, %v1697
      %v1699 = vrcp.pop %v1681
      %v1700 = vmul.f32 1.0, %v1699
      %v1701 = vrcp.pop %v1682
      %v1702 = vmul.f32 1.0, %v1701
      %v1703 = vmul.f32 %v1633, %v1684
      %v1704 = vmul.f32 %v1634, %v1686
      %v1705 = vmul.f32 %v1635, %v1688
      %v1706 = vmul.f32 %v1636, %v1690
      %v1707 = vmul.f32 %v1637, %v1692
      %v1708 = vmul.f32 %v1638, %v1694
      %v1709 = vmul.f32 %v1639, %v1696
      %v1710 = vmul.f32 %v1640, %v1698
      %v1711 = vmul.f32 %v1641, %v1700
      %v1712 = vmul.f32 %v1642, %v1702
      %vm1723 = vcmask 1041408
      %v1724 = vrot.slane %v1703, 6
      %v1725 = vrot.slane %v1704, 6
      %v1726 = vsel %vm1723, %v1724, %v1725
      %v1727 = vrot.slane %v1705, 6
      %v1728 = vsel %vm1723, %v1725, %v1727
      %v1729 = vrot.slane %v1706, 6
      %v1730 = vsel %vm1723, %v1727, %v1729
      %v1731 = vrot.slane %v1707, 6
      %v1732 = vsel %vm1723, %v1729, %v1731
      %v1733 = vrot.slane %v1708, 6
      %v1734 = vrot.slane %v1709, 6
      %v1735 = vsel %vm1723, %v1733, %v1734
      %v1736 = vrot.slane %v1710, 6
      %v1737 = vsel %vm1723, %v1734, %v1736
      %v1738 = vrot.slane %v1711, 6
      %v1739 = vsel %vm1723, %v1736, %v1738
      %v1740 = vrot.slane %v1712, 6
      %v1741 = vsel %vm1723, %v1738, %v1740
      %s1750 = scalar_lea.vmem %s7, %s1291
      %v1751 = vld [vmem:[%s1750] sm:$0xff]
      %v1752 = vld [vmem:[%s1750 + $0x8] sm:$0xff]
      %v1753 = vld [vmem:[%s1750 + $0x10] sm:$0xff]
      %v1754 = vld [vmem:[%s1750 + $0x18] sm:$0xff]
      %v1755 = vld [vmem:[%s1750 + $0x20] sm:$0xff]
      %v1756 = vld [vmem:[%s1750 + $0x28] sm:$0xff]
      %v1757 = vld [vmem:[%s1750 + $0x30] sm:$0xff]
      %v1758 = vld [vmem:[%s1750 + $0x38] sm:$0xff]
      %v1759 = vld [vmem:[%s1750 + $0x40] sm:$0xff]
      %v1760 = vld [vmem:[%s1750 + $0x48] sm:$0xff]
      %v1761 = vld [vmem:[%s1750 + $0x50] sm:$0xff]
      %v1762 = vld [vmem:[%s1750 + $0x58] sm:$0xff]
      %v1763 = vld [vmem:[%s1750 + $0x60] sm:$0xff]
      %v1764 = vld [vmem:[%s1750 + $0x68] sm:$0xff]
      %v1765 = vld [vmem:[%s1750 + $0x70] sm:$0xff]
      %v1766 = vld [vmem:[%s1750 + $0x78] sm:$0xff]
      %v1768 = vlaneseq
      %v1769 = vshrl.u32 %v1768, 7
      %v1770 = vsub.s32 0, %v1769
      %v1771 = vrot.slane %v1282, %v1770
      %1773 = vmatprep.subr.mxu0 0.0
      %1774 = vmatpush1.msra.mxu0 %v1766
      %1775 = vmatprep.subr.mxu0 0.0
      %1776 = vmatpush1.msra.mxu0 %v1765
      %1777 = vmatprep.subr.mxu0 0.0
      %1778 = vmatpush1.msra.mxu0 %v1764
      %1779 = vmatprep.subr.mxu0 0.0
      %1780 = vmatpush1.msra.mxu0 %v1763
      %1781 = vmatprep.subr.mxu0 0.0
      %1782 = vmatpush1.msra.mxu0 %v1762
      %1783 = vmatprep.subr.mxu0 0.0
      %1784 = vmatpush1.msra.mxu0 %v1761
      %1785 = vmatprep.subr.mxu0 0.0
      %1786 = vmatpush1.msra.mxu0 %v1760
      %1787 = vmatprep.subr.mxu0 0.0
      %1788 = vmatpush1.msra.mxu0 %v1759
      %1789 = vmatprep.subr.mxu0 0.0
      %1790 = vmatpush1.msra.mxu0 %v1758
      %1791 = vmatprep.subr.mxu0 0.0
      %1792 = vmatpush1.msra.mxu0 %v1757
      %1793 = vmatprep.subr.mxu0 0.0
      %1794 = vmatpush1.msra.mxu0 %v1756
      %1795 = vmatprep.subr.mxu0 0.0
      %1796 = vmatpush1.msra.mxu0 %v1755
      %1797 = vmatprep.subr.mxu0 0.0
      %1798 = vmatpush1.msra.mxu0 %v1754
      %1799 = vmatprep.subr.mxu0 0.0
      %1800 = vmatpush1.msra.mxu0 %v1753
      %1801 = vmatprep.subr.mxu0 0.0
      %1802 = vmatpush1.msra.mxu0 %v1752
      %1803 = vmatprep.subr.mxu0 0.0
      %1804 = vmatpush1.msra.mxu0 %v1751
      %1805 = vmatprep.subr.mxu0 0.0
      %1806 = vmatpush2.msra.mxu0 0.0
      %1807 = vmatprep.subr.mxu0 0.0
      %1808 = vmatpush2.msra.mxu0 0.0
      %1809 = vmatprep.subr.mxu0 0.0
      %1810 = vmatpush2.msra.mxu0 0.0
      %1811 = vmatprep.subr.mxu0 0.0
      %1812 = vmatpush2.msra.mxu0 0.0
      %1813 = vmatprep.subr.mxu0 0.0
      %1814 = vmatpush2.msra.mxu0 0.0
      %1815 = vmatprep.subr.mxu0 0.0
      %1816 = vmatpush2.msra.mxu0 0.0
      %1817 = vmatprep.subr.mxu0 0.0
      %1818 = vmatpush2.msra.mxu0 0.0
      %1819 = vmatprep.subr.mxu0 0.0
      %1820 = vmatpush2.msra.mxu0 0.0
      %1821 = vmatprep.subr.mxu0 0.0
      %1822 = vmatpush2.msra.mxu0 0.0
      %1823 = vmatprep.subr.mxu0 0.0
      %1824 = vmatpush2.msra.mxu0 0.0
      %1825 = vmatprep.subr.mxu0 0.0
      %1826 = vmatpush2.msra.mxu0 0.0
      %1827 = vmatprep.subr.mxu0 0.0
      %1828 = vmatpush2.msra.mxu0 0.0
      %1829 = vmatprep.subr.mxu0 0.0
      %1830 = vmatpush2.msra.mxu0 0.0
      %1831 = vmatprep.subr.mxu0 0.0
      %1832 = vmatpush2.msra.mxu0 0.0
      %1833 = vmatprep.subr.mxu0 0.0
      %1834 = vmatpush2.msra.mxu0 0.0
      %1835 = vmatprep.subr.mxu0 0.0
      %1836 = vmatpush2.msra.mxu0 0.0
      %1837 = vmatprep.mubr.f32.mxu0 0.0
      %1838 = vmatmul.mubr.f32.gmra.mxu0 %v1726
      %v1839 = vpop.f32.mrf.mxu0
      %v1840 = vadd.f32 %v1771, %v1839
      %v1841 = vpop.f32.mrf.mxu0
      %1842 = vmatprep.mubr.f32.mxu0 0.0
      %1843 = vmatmul.mubr.f32.gmra.mxu0 %v1728
      %v1844 = vpop.f32.mrf.mxu0
      %v1845 = vadd.f32 %v1771, %v1844
      %v1846 = vpop.f32.mrf.mxu0
      %1847 = vmatprep.mubr.f32.mxu0 0.0
      %1848 = vmatmul.mubr.f32.gmra.mxu0 %v1730
      %v1849 = vpop.f32.mrf.mxu0
      %v1850 = vadd.f32 %v1771, %v1849
      %v1851 = vpop.f32.mrf.mxu0
      %1852 = vmatprep.mubr.f32.mxu0 0.0
      %1853 = vmatmul.mubr.f32.gmra.mxu0 %v1732
      %v1854 = vpop.f32.mrf.mxu0
      %v1855 = vadd.f32 %v1771, %v1854
      %v1856 = vpop.f32.mrf.mxu0
      %1857 = vmatprep.mubr.f32.mxu0 0.0
      %1858 = vmatmul.mubr.f32.gmra.mxu0 %v1735
      %v1859 = vpop.f32.mrf.mxu0
      %v1860 = vadd.f32 %v1771, %v1859
      %v1861 = vpop.f32.mrf.mxu0
      %1862 = vmatprep.mubr.f32.mxu0 0.0
      %1863 = vmatmul.mubr.f32.gmra.mxu0 %v1737
      %v1864 = vpop.f32.mrf.mxu0
      %v1865 = vadd.f32 %v1771, %v1864
      %v1866 = vpop.f32.mrf.mxu0
      %1867 = vmatprep.mubr.f32.mxu0 0.0
      %1868 = vmatmul.mubr.f32.gmra.mxu0 %v1739
      %v1869 = vpop.f32.mrf.mxu0
      %v1870 = vadd.f32 %v1771, %v1869
      %v1871 = vpop.f32.mrf.mxu0
      %1872 = vmatprep.mubr.f32.mxu0 0.0
      %1873 = vmatmul.mubr.f32.gmra.mxu0 %v1741
      %v1874 = vpop.f32.mrf.mxu0
      %v1875 = vadd.f32 %v1771, %v1874
      %v1876 = vpop.f32.mrf.mxu0
      %1877 = vdwg.mxu0
      %v1878 = vld [vmem:[%s351] sm:$0xff]
      %v1879 = vld [vmem:[%s351 + $0x8] sm:$0xff]
      %v1880 = vld [vmem:[%s351 + $0x10] sm:$0xff]
      %v1881 = vld [vmem:[%s351 + $0x18] sm:$0xff]
      %v1882 = vld [vmem:[%s351 + $0x20] sm:$0xff]
      %v1883 = vld [vmem:[%s351 + $0x28] sm:$0xff]
      %v1884 = vld [vmem:[%s351 + $0x30] sm:$0xff]
      %v1885 = vld [vmem:[%s351 + $0x38] sm:$0xff]
      %v1886 = vadd.f32 %v1840, %v1878
      %v1887 = vadd.f32 %v1845, %v1879
      %v1888 = vadd.f32 %v1850, %v1880
      %v1889 = vadd.f32 %v1855, %v1881
      %v1890 = vadd.f32 %v1860, %v1882
      %v1891 = vadd.f32 %v1865, %v1883
      %v1892 = vadd.f32 %v1870, %v1884
      %v1893 = vadd.f32 %v1875, %v1885
      %1894 = vst [vmem:[%s351] sm:$0xff] %v1886
      %1895 = vst [vmem:[%s351 + $0x8] sm:$0xff] %v1887
      %1896 = vst [vmem:[%s351 + $0x10] sm:$0xff] %v1888
      %1897 = vst [vmem:[%s351 + $0x18] sm:$0xff] %v1889
      %1898 = vst [vmem:[%s351 + $0x20] sm:$0xff] %v1890
      %1899 = vst [vmem:[%s351 + $0x28] sm:$0xff] %v1891
      %1900 = vst [vmem:[%s351 + $0x30] sm:$0xff] %v1892
      %1901 = vst [vmem:[%s351 + $0x38] sm:$0xff] %v1893
      %s1902 = smul.u32 2, %s24
      %p1903 = scmp.lt.s32.totalorder %s1902, 3
      %s1904 = scalar_select %p1903, %s1902, 3
      %s1905 = smul.addr %s1904, 4
      %s1906 = smul.addr %s1905, 8
      %s1907 = scalar_lea.vmem %s9, %s1906
      // Predicated region
      $region61: #{encoder_stage_forward.1} parent=55 // pred_check
        %p1908 = pneg %p244
      $region62: #{encoder_stage_forward.1} parent=55 // pred_check_branch
        %1910 = sbr.rel (%p1908) target = $region64
      $region63: #{encoder_stage_forward.1} parent=55 // pred_region
        %s1911 = smul.u32 2, %s24
      $region64: #{encoder_stage_forward.1} parent=55 // pred_fallthru
        _
    $region56: #{encoder_stage_forward.1} parent=5 // pred_fallthru
      _
    %p1912 = scmp.le.s32.totalorder 2, %s15
    // Predicated region
    $region65: #{encoder_stage_forward.1} parent=5 // pred_check
      %p1913 = pneg %p1912
    $region66: #{encoder_stage_forward.1} parent=5 // pred_check_branch
      %1915 = sbr.rel (%p1913) target = $region68
    $region67: #{encoder_stage_forward.1} parent=5 // pred_region
      %s1916 = ssub.s32 %s15, 2
      // Predicated region
      $region69: #{encoder_stage_forward.1} parent=67 // pred_check
        %p1917 = pneg %p250
      $region70: #{encoder_stage_forward.1} parent=67 // pred_check_branch
        %1919 = sbr.rel (%p1917) target = $region72
      $region71: #{encoder_stage_forward.1} parent=67 // pred_region
        %s1920 = smul.u32 2, %s26
        %p1921 = scmp.lt.s32.totalorder %s1920, 3
        %s1922 = scalar_select %p1921, %s1920, 3
        %s1923 = smul.addr %s1922, 4
        %s1924 = smul.addr %s1923, 8
        %s1925 = scalar_lea.vmem %s9, %s1924
      $region72: #{encoder_stage_forward.1} parent=67 // pred_fallthru
        _
    $region68: #{encoder_stage_forward.1} parent=5 // pred_fallthru
      _
  $region6: #{encoder_stage_forward.1} parent=0 // loop_footer
    %s19 = sadd.s32 1, %s15
  $region7: #{encoder_stage_forward.1} parent=0 // loop_footer_branch
    %14 = sbr.rel target = $region3
  $region8: #{encoder_stage_forward.1} parent=0 // loop_exit
    _

</llo_original>
